<compile_context>
chip_gen: v6e
topology: v6e:2x2x1
jax: 0.10.0
libtpu: 0.0.40
codegen_flags: <defaults>
</compile_context>

<pallas_src>
import functools

import jax
import jax.numpy as jnp
from jax.experimental import pallas as pl
from jax.experimental.pallas import tpu as pltpu


def _round_up(x, m):
    return (x + m - 1) // m * m


def _powerprop_transform(w, alpha):
    """w * |w|**(alpha - 1) without jnp.power for the common cases."""
    if alpha == 1.0:
        return w
    if float(alpha).is_integer() and alpha >= 2.0:
        a = jnp.abs(w)
        p = a
        for _ in range(int(alpha) - 2):   # alpha=2 -> single VPU mul below
            p = p * a
        return w * p
    # Generic non-integer alpha: exp/log on the EUP. The where() keeps the
    # zero padding added by the wrapper finite (real zeros match the torch
    # reference for alpha > 1; for alpha < 1 torch would produce NaN there).
    a = jnp.abs(w)
    p = jnp.exp((alpha - 1.0) * jnp.log(a))
    return jnp.where(w == 0.0, jnp.zeros_like(w), w * p)


def _fused_mlp_kernel(*refs, alpha, num_layers, use_bf16):
    x_ref = refs[0]
    o_ref = refs[1 + 2 * num_layers]
    compute_dtype = jnp.bfloat16 if use_bf16 else jnp.float32
    # (B, K) contracted with (K, N) -> (B, N); out_features stays on lanes.
    dims = (((1,), (0,)), ((), ()))

    h = x_ref[...].astype(jnp.float32)
    for i in range(num_layers):
        w_ref = refs[1 + 2 * i]
        b_ref = refs[2 + 2 * i]
        w_eff = _powerprop_transform(w_ref[...], alpha)
        y = jax.lax.dot_general(
            h.astype(compute_dtype),
            w_eff.astype(compute_dtype),
            dimension_numbers=dims,
            preferred_element_type=jnp.float32,
        )
        y = y + b_ref[...]                      # (1, N) broadcasts over batch
        if i < num_layers - 1:
            y = jnp.maximum(y, 0.0)             # ReLU (f32, VPU)
        h = y
    o_ref[...] = h.astype(o_ref.dtype)


@functools.partial(jax.jit, static_argnames=("alpha", "use_bf16"))
def mlp_forward(x, params, *, alpha, use_bf16=True):
    """MLP.forward(inputs, masks=None) as a single fused Pallas kernel."""
    # TODO(synk): optional per-layer `masks` multiply on weights not wired in
    # (masks=None forward path reproduced exactly).
    batch, in_features = x.shape
    num_layers = len(params)
    assert params[0][0].shape[1] == in_features

    # Padded (lane-dense) feature sizes; out of layer i feeds in of layer i+1.
    in_p = [_round_up(w.shape[1], 128) for (w, _) in params]
    out_p = [_round_up(w.shape[0], 128) for (w, _) in params]
    for i in range(num_layers - 1):
        assert params[i][0].shape[0] == params[i + 1][0].shape[1]
        assert out_p[i] == in_p[i + 1]

    # Batch tiling: single block up to 256 rows, 256-row blocks beyond that
    # (parallel grid axis -> megacore / dual-TC sharding on v7x).
    tm = _round_up(batch, 8) if batch <= 256 else 256
    batch_p = _round_up(batch, tm)

    x_pad = jnp.zeros((batch_p, in_p[0]), x.dtype).at[:batch, :in_features].set(x)

    inputs = [x_pad]
    in_specs = [pl.BlockSpec((tm, in_p[0]), lambda i: (i, 0))]
    for li, (w, b) in enumerate(params):
        out_f, in_f = w.shape
        # Pre-transpose to (in, out) and zero-pad both dims to 128 multiples.
        w_t = jnp.zeros((in_p[li], out_p[li]), w.dtype).at[:in_f, :out_f].set(w.T)
        b_p = jnp.zeros((1, out_p[li]), b.dtype).at[0, :out_f].set(b)
        inputs += [w_t, b_p]
        in_specs += [
            pl.BlockSpec((in_p[li], out_p[li]), lambda i: (0, 0)),
            pl.BlockSpec((1, out_p[li]), lambda i: (0, 0)),
        ]

    kernel = functools.partial(
        _fused_mlp_kernel,
        alpha=float(alpha),
        num_layers=num_layers,
        use_bf16=use_bf16,
    )

    out_padded = pl.pallas_call(
        kernel,
        out_shape=jax.ShapeDtypeStruct((batch_p, out_p[-1]), x.dtype),
        grid=(batch_p // tm,),
        in_specs=in_specs,
        out_specs=pl.BlockSpec((tm, out_p[-1]), lambda i: (i, 0)),
        compiler_params=pltpu.CompilerParams(
            dimension_semantics=("parallel",),
        ),
    )(*inputs)

    out_features = params[-1][0].shape[0]
    return out_padded[:batch, :out_features]


def mlp_forward_ref(x, params, *, alpha):
    """Pure-JAX f32 reference matching the PyTorch semantics."""
    num_layers = len(params)
    for i, (w, b) in enumerate(params):
        w_eff = w * jnp.power(jnp.abs(w), alpha - 1.0)
        x = x @ w_eff.T + b
        if i < num_layers - 1:
            x = jnp.maximum(x, 0.0)
    return x


def init_params(key, input_sizes=(784, 300, 100), output_sizes=(300, 100, 10)):
    params = []
    for in_f, out_f in zip(input_sizes, output_sizes):
        key, kw, kb = jax.random.split(key, 3)
        # Deterministic synthetic init (module's __init__ only defines shapes).
        w = jax.random.normal(kw, (out_f, in_f), dtype=jnp.float32) * 0.05
        b = jax.random.normal(kb, (out_f,), dtype=jnp.float32) * 0.01
        params.append((w, b))
    return params


if __name__ == "__main__":
    alpha = 2.0
    key = jax.random.PRNGKey(0)
    key, kx = jax.random.split(key)

    # Small batch; feature sizes follow the module defaults:
    # (784, 300, 100) -> (300, 100, 10).
    batch = 8
    x = jax.random.normal(kx, (batch, 784), dtype=jnp.float32)
    params = init_params(key)

    out = mlp_forward(x, params, alpha=alpha)
    out = jax.block_until_ready(out)

    ref = mlp_forward_ref(x, params, alpha=alpha)
    assert out.shape == (batch, 10), out.shape
    # bf16 MXU inputs with f32 accumulation -> relaxed tolerance vs f32 ref.
    assert jnp.allclose(out, ref, atol=1e-2, rtol=1e-2), "mismatch vs reference"

    print("KERNEL_OK")
</pallas_src>

<mosaic_0001>
module attributes {stable_mosaic.version = 11 : i64} {
  func.func @_fused_mlp_kernel(%arg0: i32, %arg1: memref<8x896xf32, #tpu.memory_space<vmem>>, %arg2: memref<896x384xf32, #tpu.memory_space<vmem>>, %arg3: memref<1x384xf32, #tpu.memory_space<vmem>>, %arg4: memref<384x128xf32, #tpu.memory_space<vmem>>, %arg5: memref<1x128xf32, #tpu.memory_space<vmem>>, %arg6: memref<128x128xf32, #tpu.memory_space<vmem>>, %arg7: memref<1x128xf32, #tpu.memory_space<vmem>>, %arg8: memref<8x128xf32, #tpu.memory_space<vmem>>) attributes {dimension_semantics = [#tpu.dimension_semantics<parallel>], iteration_bounds = array<i64: 1>, scalar_prefetch = 0 : i64, scratch_operands = 0 : i64, tpu.core_type = #tpu.core_type<tc>, window_params = [{transform_indices = @transform_0, window_bounds = array<i64: 8, 896>}, {pipeline_mode = #tpu.pipeline_mode<synchronous>, transform_indices = @transform_1, window_bounds = array<i64: 896, 384>}, {pipeline_mode = #tpu.pipeline_mode<synchronous>, transform_indices = @transform_2, window_bounds = array<i64: 1, 384>}, {pipeline_mode = #tpu.pipeline_mode<synchronous>, transform_indices = @transform_3, window_bounds = array<i64: 384, 128>}, {pipeline_mode = #tpu.pipeline_mode<synchronous>, transform_indices = @transform_4, window_bounds = array<i64: 1, 128>}, {pipeline_mode = #tpu.pipeline_mode<synchronous>, transform_indices = @transform_5, window_bounds = array<i64: 128, 128>}, {pipeline_mode = #tpu.pipeline_mode<synchronous>, transform_indices = @transform_6, window_bounds = array<i64: 1, 128>}, {transform_indices = @transform_7, window_bounds = array<i64: 8, 128>}]} {
    %c0 = arith.constant 0 : index
    %c0_0 = arith.constant 0 : index
    %0 = vector.load %arg1[%c0, %c0_0] : memref<8x896xf32, #tpu.memory_space<vmem>>, vector<8x896xf32>
    %c0_1 = arith.constant 0 : index
    %c0_2 = arith.constant 0 : index
    %1 = vector.load %arg2[%c0_1, %c0_2] : memref<896x384xf32, #tpu.memory_space<vmem>>, vector<896x384xf32>
    %2 = math.absf %1 : vector<896x384xf32>
    %3 = arith.mulf %1, %2 : vector<896x384xf32>
    %4 = arith.truncf %0 : vector<8x896xf32> to vector<8x896xbf16>
    %5 = arith.truncf %3 : vector<896x384xf32> to vector<896x384xbf16>
    %cst = arith.constant dense<0.000000e+00> : vector<8x384xf32>
    %6 = tpu.matmul %4, %5, %cst {dimension_numbers = #tpu.dot_dimension_numbers<[1], [0], [0], [1], [0, 0, 1, 1], [], []>} : vector<8x896xbf16>, vector<896x384xbf16>, vector<8x384xf32> -> vector<8x384xf32>
    %c0_3 = arith.constant 0 : index
    %c0_4 = arith.constant 0 : index
    %7 = vector.load %arg3[%c0_3, %c0_4] : memref<1x384xf32, #tpu.memory_space<vmem>>, vector<1x384xf32>
    %8 = vector.broadcast %7 : vector<1x384xf32> to vector<8x384xf32>
    %9 = arith.addf %6, %8 : vector<8x384xf32>
    %cst_5 = arith.constant 0.000000e+00 : f32
    %10 = vector.broadcast %cst_5 : f32 to vector<8x384xf32>
    %11 = arith.maximumf %9, %10 : vector<8x384xf32>
    %c0_6 = arith.constant 0 : index
    %c0_7 = arith.constant 0 : index
    %12 = vector.load %arg4[%c0_6, %c0_7] : memref<384x128xf32, #tpu.memory_space<vmem>>, vector<384x128xf32>
    %13 = math.absf %12 : vector<384x128xf32>
    %14 = arith.mulf %12, %13 : vector<384x128xf32>
    %15 = arith.truncf %11 : vector<8x384xf32> to vector<8x384xbf16>
    %16 = arith.truncf %14 : vector<384x128xf32> to vector<384x128xbf16>
    %cst_8 = arith.constant dense<0.000000e+00> : vector<8x128xf32>
    %17 = tpu.matmul %15, %16, %cst_8 {dimension_numbers = #tpu.dot_dimension_numbers<[1], [0], [0], [1], [0, 0, 1, 1], [], []>} : vector<8x384xbf16>, vector<384x128xbf16>, vector<8x128xf32> -> vector<8x128xf32>
    %c0_9 = arith.constant 0 : index
    %c0_10 = arith.constant 0 : index
    %18 = vector.load %arg5[%c0_9, %c0_10] : memref<1x128xf32, #tpu.memory_space<vmem>>, vector<1x128xf32>
    %19 = vector.broadcast %18 : vector<1x128xf32> to vector<8x128xf32>
    %20 = arith.addf %17, %19 : vector<8x128xf32>
    %cst_11 = arith.constant 0.000000e+00 : f32
    %21 = vector.broadcast %cst_11 : f32 to vector<8x128xf32>
    %22 = arith.maximumf %20, %21 : vector<8x128xf32>
    %c0_12 = arith.constant 0 : index
    %c0_13 = arith.constant 0 : index
    %23 = vector.load %arg6[%c0_12, %c0_13] : memref<128x128xf32, #tpu.memory_space<vmem>>, vector<128x128xf32>
    %24 = math.absf %23 : vector<128x128xf32>
    %25 = arith.mulf %23, %24 : vector<128x128xf32>
    %26 = arith.truncf %22 : vector<8x128xf32> to vector<8x128xbf16>
    %27 = arith.truncf %25 : vector<128x128xf32> to vector<128x128xbf16>
    %cst_14 = arith.constant dense<0.000000e+00> : vector<8x128xf32>
    %28 = tpu.matmul %26, %27, %cst_14 {dimension_numbers = #tpu.dot_dimension_numbers<[1], [0], [0], [1], [0, 0, 1, 1], [], []>} : vector<8x128xbf16>, vector<128x128xbf16>, vector<8x128xf32> -> vector<8x128xf32>
    %c0_15 = arith.constant 0 : index
    %c0_16 = arith.constant 0 : index
    %29 = vector.load %arg7[%c0_15, %c0_16] : memref<1x128xf32, #tpu.memory_space<vmem>>, vector<1x128xf32>
    %30 = vector.broadcast %29 : vector<1x128xf32> to vector<8x128xf32>
    %31 = arith.addf %28, %30 : vector<8x128xf32>
    %c0_17 = arith.constant 0 : index
    %c0_18 = arith.constant 0 : index
    %32 = vector.load %arg8[%c0_17, %c0_18] : memref<8x128xf32, #tpu.memory_space<vmem>>, vector<8x128xf32>
    tpu.vector_store %arg8[%c0_17, %c0_18], %31 {strides = array<i32>} : memref<8x128xf32, #tpu.memory_space<vmem>>, vector<8x128xf32>,
    return
  }
  func.func @transform_0(%arg0: i32) -> (i32, i32) {
    %c0_i32 = arith.constant 0 : i32
    %c0_i32_0 = arith.constant 0 : i32
    return %arg0, %c0_i32 : i32, i32
  }
  func.func @transform_1(%arg0: i32) -> (i32, i32) {
    %c0_i32 = arith.constant 0 : i32
    %c0_i32_0 = arith.constant 0 : i32
    %c0_i32_1 = arith.constant 0 : i32
    return %c0_i32, %c0_i32_0 : i32, i32
  }
  func.func @transform_2(%arg0: i32) -> (i32, i32) {
    %c0_i32 = arith.constant 0 : i32
    %c0_i32_0 = arith.constant 0 : i32
    %c0_i32_1 = arith.constant 0 : i32
    return %c0_i32, %c0_i32_0 : i32, i32
  }
  func.func @transform_3(%arg0: i32) -> (i32, i32) {
    %c0_i32 = arith.constant 0 : i32
    %c0_i32_0 = arith.constant 0 : i32
    %c0_i32_1 = arith.constant 0 : i32
    return %c0_i32, %c0_i32_0 : i32, i32
  }
  func.func @transform_4(%arg0: i32) -> (i32, i32) {
    %c0_i32 = arith.constant 0 : i32
    %c0_i32_0 = arith.constant 0 : i32
    %c0_i32_1 = arith.constant 0 : i32
    return %c0_i32, %c0_i32_0 : i32, i32
  }
  func.func @transform_5(%arg0: i32) -> (i32, i32) {
    %c0_i32 = arith.constant 0 : i32
    %c0_i32_0 = arith.constant 0 : i32
    %c0_i32_1 = arith.constant 0 : i32
    return %c0_i32, %c0_i32_0 : i32, i32
  }
  func.func @transform_6(%arg0: i32) -> (i32, i32) {
    %c0_i32 = arith.constant 0 : i32
    %c0_i32_0 = arith.constant 0 : i32
    %c0_i32_1 = arith.constant 0 : i32
    return %c0_i32, %c0_i32_0 : i32, i32
  }
  func.func @transform_7(%arg0: i32) -> (i32, i32) {
    %c0_i32 = arith.constant 0 : i32
    %c0_i32_0 = arith.constant 0 : i32
    return %arg0, %c0_i32 : i32, i32
  }
}

</mosaic_0001>

<llo_original>
// kernel: mlp_forward.1
$region0: #{mlp_forward.1}
  #allocation0 [shape = 'u32[]', space=smem, size = 0x4, offset = 0x4, fixed_abs, tag = 'smem constant byte address 0x4 - core index']
  #allocation1 [shape = 'u32[144,128]{1,0:T(1,128)}', space=vmem, size = 0x12000, scoped, tag = 'internal scratch']
  %s0 = inlined_call_operand.vmem [shape: f32[8,896], index: 0, kind: input, shape index: {}]
  %s1 = inlined_call_operand.vmem [shape: f32[896,384], index: 1, kind: input, shape index: {}]
  %s2 = inlined_call_operand.vmem [shape: f32[1,384], index: 2, kind: input, shape index: {}]
  %s3 = inlined_call_operand.vmem [shape: f32[384,128], index: 3, kind: input, shape index: {}]
  %s4 = inlined_call_operand.vmem [shape: f32[1,128], index: 4, kind: input, shape index: {}]
  %s5 = inlined_call_operand.vmem [shape: f32[128,128], index: 5, kind: input, shape index: {}]
  %s6 = inlined_call_operand.vmem [shape: f32[1,128], index: 6, kind: input, shape index: {}]
  %s7 = inlined_call_operand.hbm [shape: f32[8,128], index: 7, kind: output, shape index: {}]
  %s8 = sld [smem:[#allocation0]]
  $region38: #{mlp_forward.1} parent=0
    _
  %s10 = ssub.s32 1, %s8
  %s11 = scalar_select 0, %s10, %s8
  $region1: #{mlp_forward.1} parent=0
    #allocation2 [shape = 'u8[4096]{0}', space=vmem, size = 0x1000, scoped, tag = 'output window, operand 0, single buffered']
    #allocation3 [shape = 's32[1]{0}', space=sflag, size = 0x4, scoped, tag = 'scoped memory for mlp_forward.1']
    %12 = vsyncpa [#allocation3], 0
    // Predicated region
    $region2: #{mlp_forward.1} parent=1 // pred_check
      _
    $region3: #{mlp_forward.1} parent=1 // pred_check_branch
      %14 = sbr.rel (0) target = $region5
    $region4: #{mlp_forward.1} parent=1 // pred_region
      _
    $region5: #{mlp_forward.1} parent=1 // pred_fallthru
      _
    // Predicated region
    $region6: #{mlp_forward.1} parent=1 // pred_check
      _
    $region7: #{mlp_forward.1} parent=1 // pred_check_branch
      %16 = sbr.rel (0) target = $region9
    $region8: #{mlp_forward.1} parent=1 // pred_region
      _
    $region9: #{mlp_forward.1} parent=1 // pred_fallthru
      _
    // Predicated region
    $region10: #{mlp_forward.1} parent=1 // pred_check
      _
    $region11: #{mlp_forward.1} parent=1 // pred_check_branch
      %18 = sbr.rel (0) target = $region13
    $region12: #{mlp_forward.1} parent=1 // pred_region
      _
    $region13: #{mlp_forward.1} parent=1 // pred_fallthru
      _
    // Predicated region
    $region14: #{mlp_forward.1} parent=1 // pred_check
      _
    $region15: #{mlp_forward.1} parent=1 // pred_check_branch
      %20 = sbr.rel (0) target = $region17
    $region16: #{mlp_forward.1} parent=1 // pred_region
      _
    $region17: #{mlp_forward.1} parent=1 // pred_fallthru
      _
    // Predicated region
    $region18: #{mlp_forward.1} parent=1 // pred_check
      _
    $region19: #{mlp_forward.1} parent=1 // pred_check_branch
      %22 = sbr.rel (0) target = $region21
    $region20: #{mlp_forward.1} parent=1 // pred_region
      _
    $region21: #{mlp_forward.1} parent=1 // pred_fallthru
      _
    // Predicated region
    $region22: #{mlp_forward.1} parent=1 // pred_check
      _
    $region23: #{mlp_forward.1} parent=1 // pred_check_branch
      %24 = sbr.rel (0) target = $region25
    $region24: #{mlp_forward.1} parent=1 // pred_region
      _
    $region25: #{mlp_forward.1} parent=1 // pred_fallthru
      _
    // Predicated region
    $region26: #{mlp_forward.1} parent=1 // pred_check
      _
    $region27: #{mlp_forward.1} parent=1 // pred_check_branch
      %26 = sbr.rel (0) target = $region29
    $region28: #{mlp_forward.1} parent=1 // pred_region
      _
    $region29: #{mlp_forward.1} parent=1 // pred_fallthru
      _
    %v28 = vld [vmem:[%s0] sm:$0xff]
    %v29 = vld [vmem:[%s0 + $0x8] sm:$0xff]
    %v30 = vld [vmem:[%s0 + $0x10] sm:$0xff]
    %v31 = vld [vmem:[%s0 + $0x18] sm:$0xff]
    %v32 = vld [vmem:[%s0 + $0x20] sm:$0xff]
    %v33 = vld [vmem:[%s0 + $0x28] sm:$0xff]
    %v34 = vld [vmem:[%s0 + $0x30] sm:$0xff]
    %v35 = vld [vmem:[%s1] sm:$0xff]
    %v36 = vld [vmem:[%s1 + $0x8] sm:$0xff]
    %v37 = vld [vmem:[%s1 + $0x10] sm:$0xff]
    %v38 = vld [vmem:[%s1 + $0x18] sm:$0xff]
    %v39 = vld [vmem:[%s1 + $0x20] sm:$0xff]
    %v40 = vld [vmem:[%s1 + $0x28] sm:$0xff]
    %v41 = vld [vmem:[%s1 + $0x30] sm:$0xff]
    %v42 = vld [vmem:[%s1 + $0x38] sm:$0xff]
    %v43 = vld [vmem:[%s1 + $0x40] sm:$0xff]
    %v44 = vld [vmem:[%s1 + $0x48] sm:$0xff]
    %v45 = vld [vmem:[%s1 + $0x50] sm:$0xff]
    %v46 = vld [vmem:[%s1 + $0x58] sm:$0xff]
    %v47 = vld [vmem:[%s1 + $0x60] sm:$0xff]
    %v48 = vld [vmem:[%s1 + $0x68] sm:$0xff]
    %v49 = vld [vmem:[%s1 + $0x70] sm:$0xff]
    %v50 = vld [vmem:[%s1 + $0x78] sm:$0xff]
    %v51 = vld [vmem:[%s1 + $0x80] sm:$0xff]
    %v52 = vld [vmem:[%s1 + $0x88] sm:$0xff]
    %v53 = vld [vmem:[%s1 + $0x90] sm:$0xff]
    %v54 = vld [vmem:[%s1 + $0x98] sm:$0xff]
    %v55 = vld [vmem:[%s1 + $0xa0] sm:$0xff]
    %v56 = vld [vmem:[%s1 + $0xa8] sm:$0xff]
    %v57 = vld [vmem:[%s1 + $0xb0] sm:$0xff]
    %v58 = vld [vmem:[%s1 + $0xb8] sm:$0xff]
    %v59 = vld [vmem:[%s1 + $0xc0] sm:$0xff]
    %v60 = vld [vmem:[%s1 + $0xc8] sm:$0xff]
    %v61 = vld [vmem:[%s1 + $0xd0] sm:$0xff]
    %v62 = vld [vmem:[%s1 + $0xd8] sm:$0xff]
    %v63 = vld [vmem:[%s1 + $0xe0] sm:$0xff]
    %v64 = vld [vmem:[%s1 + $0xe8] sm:$0xff]
    %v65 = vld [vmem:[%s1 + $0xf0] sm:$0xff]
    %v66 = vld [vmem:[%s1 + $0xf8] sm:$0xff]
    %v67 = vld [vmem:[%s1 + $0x100] sm:$0xff]
    %v68 = vld [vmem:[%s1 + $0x108] sm:$0xff]
    %v69 = vld [vmem:[%s1 + $0x110] sm:$0xff]
    %v70 = vld [vmem:[%s1 + $0x118] sm:$0xff]
    %v71 = vld [vmem:[%s1 + $0x120] sm:$0xff]
    %v72 = vld [vmem:[%s1 + $0x128] sm:$0xff]
    %v73 = vld [vmem:[%s1 + $0x130] sm:$0xff]
    %v74 = vld [vmem:[%s1 + $0x138] sm:$0xff]
    %v75 = vld [vmem:[%s1 + $0x140] sm:$0xff]
    %v76 = vld [vmem:[%s1 + $0x148] sm:$0xff]
    %v77 = vld [vmem:[%s1 + $0x150] sm:$0xff]
    %v78 = vld [vmem:[%s1 + $0x158] sm:$0xff]
    %v79 = vld [vmem:[%s1 + $0x160] sm:$0xff]
    %v80 = vld [vmem:[%s1 + $0x168] sm:$0xff]
    %v81 = vld [vmem:[%s1 + $0x170] sm:$0xff]
    %v82 = vld [vmem:[%s1 + $0x178] sm:$0xff]
    %v83 = vld [vmem:[%s1 + $0x180] sm:$0xff]
    %v84 = vld [vmem:[%s1 + $0x188] sm:$0xff]
    %v85 = vld [vmem:[%s1 + $0x190] sm:$0xff]
    %v86 = vld [vmem:[%s1 + $0x198] sm:$0xff]
    %v87 = vld [vmem:[%s1 + $0x1a0] sm:$0xff]
    %v88 = vld [vmem:[%s1 + $0x1a8] sm:$0xff]
    %v89 = vld [vmem:[%s1 + $0x1b0] sm:$0xff]
    %v90 = vld [vmem:[%s1 + $0x1b8] sm:$0xff]
    %v91 = vld [vmem:[%s1 + $0x1c0] sm:$0xff]
    %v92 = vld [vmem:[%s1 + $0x1c8] sm:$0xff]
    %v93 = vld [vmem:[%s1 + $0x1d0] sm:$0xff]
    %v94 = vld [vmem:[%s1 + $0x1d8] sm:$0xff]
    %v95 = vld [vmem:[%s1 + $0x1e0] sm:$0xff]
    %v96 = vld [vmem:[%s1 + $0x1e8] sm:$0xff]
    %v97 = vld [vmem:[%s1 + $0x1f0] sm:$0xff]
    %v98 = vld [vmem:[%s1 + $0x1f8] sm:$0xff]
    %v99 = vld [vmem:[%s1 + $0x200] sm:$0xff]
    %v100 = vld [vmem:[%s1 + $0x208] sm:$0xff]
    %v101 = vld [vmem:[%s1 + $0x210] sm:$0xff]
    %v102 = vld [vmem:[%s1 + $0x218] sm:$0xff]
    %v103 = vld [vmem:[%s1 + $0x220] sm:$0xff]
    %v104 = vld [vmem:[%s1 + $0x228] sm:$0xff]
    %v105 = vld [vmem:[%s1 + $0x230] sm:$0xff]
    %v106 = vld [vmem:[%s1 + $0x238] sm:$0xff]
    %v107 = vld [vmem:[%s1 + $0x240] sm:$0xff]
    %v108 = vld [vmem:[%s1 + $0x248] sm:$0xff]
    %v109 = vld [vmem:[%s1 + $0x250] sm:$0xff]
    %v110 = vld [vmem:[%s1 + $0x258] sm:$0xff]
    %v111 = vld [vmem:[%s1 + $0x260] sm:$0xff]
    %v112 = vld [vmem:[%s1 + $0x268] sm:$0xff]
    %v113 = vld [vmem:[%s1 + $0x270] sm:$0xff]
    %v114 = vld [vmem:[%s1 + $0x278] sm:$0xff]
    %v115 = vld [vmem:[%s1 + $0x280] sm:$0xff]
    %v116 = vld [vmem:[%s1 + $0x288] sm:$0xff]
    %v117 = vld [vmem:[%s1 + $0x290] sm:$0xff]
    %v118 = vld [vmem:[%s1 + $0x298] sm:$0xff]
    %v119 = vld [vmem:[%s1 + $0x2a0] sm:$0xff]
    %v120 = vld [vmem:[%s1 + $0x2a8] sm:$0xff]
    %v121 = vld [vmem:[%s1 + $0x2b0] sm:$0xff]
    %v122 = vld [vmem:[%s1 + $0x2b8] sm:$0xff]
    %v123 = vld [vmem:[%s1 + $0x2c0] sm:$0xff]
    %v124 = vld [vmem:[%s1 + $0x2c8] sm:$0xff]
    %v125 = vld [vmem:[%s1 + $0x2d0] sm:$0xff]
    %v126 = vld [vmem:[%s1 + $0x2d8] sm:$0xff]
    %v127 = vld [vmem:[%s1 + $0x2e0] sm:$0xff]
    %v128 = vld [vmem:[%s1 + $0x2e8] sm:$0xff]
    %v129 = vld [vmem:[%s1 + $0x2f0] sm:$0xff]
    %v130 = vld [vmem:[%s1 + $0x2f8] sm:$0xff]
    %v131 = vld [vmem:[%s1 + $0x300] sm:$0xff]
    %v132 = vld [vmem:[%s1 + $0x308] sm:$0xff]
    %v133 = vld [vmem:[%s1 + $0x310] sm:$0xff]
    %v134 = vld [vmem:[%s1 + $0x318] sm:$0xff]
    %v135 = vld [vmem:[%s1 + $0x320] sm:$0xff]
    %v136 = vld [vmem:[%s1 + $0x328] sm:$0xff]
    %v137 = vld [vmem:[%s1 + $0x330] sm:$0xff]
    %v138 = vld [vmem:[%s1 + $0x338] sm:$0xff]
    %v139 = vld [vmem:[%s1 + $0x340] sm:$0xff]
    %v140 = vld [vmem:[%s1 + $0x348] sm:$0xff]
    %v141 = vld [vmem:[%s1 + $0x350] sm:$0xff]
    %v142 = vld [vmem:[%s1 + $0x358] sm:$0xff]
    %v143 = vld [vmem:[%s1 + $0x360] sm:$0xff]
    %v144 = vld [vmem:[%s1 + $0x368] sm:$0xff]
    %v145 = vld [vmem:[%s1 + $0x370] sm:$0xff]
    %v146 = vld [vmem:[%s1 + $0x378] sm:$0xff]
    %v147 = vld [vmem:[%s1 + $0x380] sm:$0xff]
    %v148 = vld [vmem:[%s1 + $0x388] sm:$0xff]
    %v149 = vld [vmem:[%s1 + $0x390] sm:$0xff]
    %v150 = vld [vmem:[%s1 + $0x398] sm:$0xff]
    %v151 = vld [vmem:[%s1 + $0x3a0] sm:$0xff]
    %v152 = vld [vmem:[%s1 + $0x3a8] sm:$0xff]
    %v153 = vld [vmem:[%s1 + $0x3b0] sm:$0xff]
    %v154 = vld [vmem:[%s1 + $0x3b8] sm:$0xff]
    %v155 = vld [vmem:[%s1 + $0x3c0] sm:$0xff]
    %v156 = vld [vmem:[%s1 + $0x3c8] sm:$0xff]
    %v157 = vld [vmem:[%s1 + $0x3d0] sm:$0xff]
    %v158 = vld [vmem:[%s1 + $0x3d8] sm:$0xff]
    %v159 = vld [vmem:[%s1 + $0x3e0] sm:$0xff]
    %v160 = vld [vmem:[%s1 + $0x3e8] sm:$0xff]
    %v161 = vld [vmem:[%s1 + $0x3f0] sm:$0xff]
    %v162 = vld [vmem:[%s1 + $0x3f8] sm:$0xff]
    %v163 = vld [vmem:[%s1 + $0x400] sm:$0xff]
    %v164 = vld [vmem:[%s1 + $0x408] sm:$0xff]
    %v165 = vld [vmem:[%s1 + $0x410] sm:$0xff]
    %v166 = vld [vmem:[%s1 + $0x418] sm:$0xff]
    %v167 = vld [vmem:[%s1 + $0x420] sm:$0xff]
    %v168 = vld [vmem:[%s1 + $0x428] sm:$0xff]
    %v169 = vld [vmem:[%s1 + $0x430] sm:$0xff]
    %v170 = vld [vmem:[%s1 + $0x438] sm:$0xff]
    %v171 = vld [vmem:[%s1 + $0x440] sm:$0xff]
    %v172 = vld [vmem:[%s1 + $0x448] sm:$0xff]
    %v173 = vld [vmem:[%s1 + $0x450] sm:$0xff]
    %v174 = vld [vmem:[%s1 + $0x458] sm:$0xff]
    %v175 = vld [vmem:[%s1 + $0x460] sm:$0xff]
    %v176 = vld [vmem:[%s1 + $0x468] sm:$0xff]
    %v177 = vld [vmem:[%s1 + $0x470] sm:$0xff]
    %v178 = vld [vmem:[%s1 + $0x478] sm:$0xff]
    %v179 = vld [vmem:[%s1 + $0x480] sm:$0xff]
    %v180 = vld [vmem:[%s1 + $0x488] sm:$0xff]
    %v181 = vld [vmem:[%s1 + $0x490] sm:$0xff]
    %v182 = vld [vmem:[%s1 + $0x498] sm:$0xff]
    %v183 = vld [vmem:[%s1 + $0x4a0] sm:$0xff]
    %v184 = vld [vmem:[%s1 + $0x4a8] sm:$0xff]
    %v185 = vld [vmem:[%s1 + $0x4b0] sm:$0xff]
    %v186 = vld [vmem:[%s1 + $0x4b8] sm:$0xff]
    %v187 = vld [vmem:[%s1 + $0x4c0] sm:$0xff]
    %v188 = vld [vmem:[%s1 + $0x4c8] sm:$0xff]
    %v189 = vld [vmem:[%s1 + $0x4d0] sm:$0xff]
    %v190 = vld [vmem:[%s1 + $0x4d8] sm:$0xff]
    %v191 = vld [vmem:[%s1 + $0x4e0] sm:$0xff]
    %v192 = vld [vmem:[%s1 + $0x4e8] sm:$0xff]
    %v193 = vld [vmem:[%s1 + $0x4f0] sm:$0xff]
    %v194 = vld [vmem:[%s1 + $0x4f8] sm:$0xff]
    %v195 = vld [vmem:[%s1 + $0x500] sm:$0xff]
    %v196 = vld [vmem:[%s1 + $0x508] sm:$0xff]
    %v197 = vld [vmem:[%s1 + $0x510] sm:$0xff]
    %v198 = vld [vmem:[%s1 + $0x518] sm:$0xff]
    %v199 = vld [vmem:[%s1 + $0x520] sm:$0xff]
    %v200 = vld [vmem:[%s1 + $0x528] sm:$0xff]
    %v201 = vld [vmem:[%s1 + $0x530] sm:$0xff]
    %v202 = vld [vmem:[%s1 + $0x538] sm:$0xff]
    %v203 = vld [vmem:[%s1 + $0x540] sm:$0xff]
    %v204 = vld [vmem:[%s1 + $0x548] sm:$0xff]
    %v205 = vld [vmem:[%s1 + $0x550] sm:$0xff]
    %v206 = vld [vmem:[%s1 + $0x558] sm:$0xff]
    %v207 = vld [vmem:[%s1 + $0x560] sm:$0xff]
    %v208 = vld [vmem:[%s1 + $0x568] sm:$0xff]
    %v209 = vld [vmem:[%s1 + $0x570] sm:$0xff]
    %v210 = vld [vmem:[%s1 + $0x578] sm:$0xff]
    %v211 = vld [vmem:[%s1 + $0x580] sm:$0xff]
    %v212 = vld [vmem:[%s1 + $0x588] sm:$0xff]
    %v213 = vld [vmem:[%s1 + $0x590] sm:$0xff]
    %v214 = vld [vmem:[%s1 + $0x598] sm:$0xff]
    %v215 = vld [vmem:[%s1 + $0x5a0] sm:$0xff]
    %v216 = vld [vmem:[%s1 + $0x5a8] sm:$0xff]
    %v217 = vld [vmem:[%s1 + $0x5b0] sm:$0xff]
    %v218 = vld [vmem:[%s1 + $0x5b8] sm:$0xff]
    %v219 = vld [vmem:[%s1 + $0x5c0] sm:$0xff]
    %v220 = vld [vmem:[%s1 + $0x5c8] sm:$0xff]
    %v221 = vld [vmem:[%s1 + $0x5d0] sm:$0xff]
    %v222 = vld [vmem:[%s1 + $0x5d8] sm:$0xff]
    %v223 = vld [vmem:[%s1 + $0x5e0] sm:$0xff]
    %v224 = vld [vmem:[%s1 + $0x5e8] sm:$0xff]
    %v225 = vld [vmem:[%s1 + $0x5f0] sm:$0xff]
    %v226 = vld [vmem:[%s1 + $0x5f8] sm:$0xff]
    %v227 = vld [vmem:[%s1 + $0x600] sm:$0xff]
    %v228 = vld [vmem:[%s1 + $0x608] sm:$0xff]
    %v229 = vld [vmem:[%s1 + $0x610] sm:$0xff]
    %v230 = vld [vmem:[%s1 + $0x618] sm:$0xff]
    %v231 = vld [vmem:[%s1 + $0x620] sm:$0xff]
    %v232 = vld [vmem:[%s1 + $0x628] sm:$0xff]
    %v233 = vld [vmem:[%s1 + $0x630] sm:$0xff]
    %v234 = vld [vmem:[%s1 + $0x638] sm:$0xff]
    %v235 = vld [vmem:[%s1 + $0x640] sm:$0xff]
    %v236 = vld [vmem:[%s1 + $0x648] sm:$0xff]
    %v237 = vld [vmem:[%s1 + $0x650] sm:$0xff]
    %v238 = vld [vmem:[%s1 + $0x658] sm:$0xff]
    %v239 = vld [vmem:[%s1 + $0x660] sm:$0xff]
    %v240 = vld [vmem:[%s1 + $0x668] sm:$0xff]
    %v241 = vld [vmem:[%s1 + $0x670] sm:$0xff]
    %v242 = vld [vmem:[%s1 + $0x678] sm:$0xff]
    %v243 = vld [vmem:[%s1 + $0x680] sm:$0xff]
    %v244 = vld [vmem:[%s1 + $0x688] sm:$0xff]
    %v245 = vld [vmem:[%s1 + $0x690] sm:$0xff]
    %v246 = vld [vmem:[%s1 + $0x698] sm:$0xff]
    %v247 = vld [vmem:[%s1 + $0x6a0] sm:$0xff]
    %v248 = vld [vmem:[%s1 + $0x6a8] sm:$0xff]
    %v249 = vld [vmem:[%s1 + $0x6b0] sm:$0xff]
    %v250 = vld [vmem:[%s1 + $0x6b8] sm:$0xff]
    %v251 = vld [vmem:[%s1 + $0x6c0] sm:$0xff]
    %v252 = vld [vmem:[%s1 + $0x6c8] sm:$0xff]
    %v253 = vld [vmem:[%s1 + $0x6d0] sm:$0xff]
    %v254 = vld [vmem:[%s1 + $0x6d8] sm:$0xff]
    %v255 = vld [vmem:[%s1 + $0x6e0] sm:$0xff]
    %v256 = vld [vmem:[%s1 + $0x6e8] sm:$0xff]
    %v257 = vld [vmem:[%s1 + $0x6f0] sm:$0xff]
    %v258 = vld [vmem:[%s1 + $0x6f8] sm:$0xff]
    %v259 = vld [vmem:[%s1 + $0x700] sm:$0xff]
    %v260 = vld [vmem:[%s1 + $0x708] sm:$0xff]
    %v261 = vld [vmem:[%s1 + $0x710] sm:$0xff]
    %v262 = vld [vmem:[%s1 + $0x718] sm:$0xff]
    %v263 = vld [vmem:[%s1 + $0x720] sm:$0xff]
    %v264 = vld [vmem:[%s1 + $0x728] sm:$0xff]
    %v265 = vld [vmem:[%s1 + $0x730] sm:$0xff]
    %v266 = vld [vmem:[%s1 + $0x738] sm:$0xff]
    %v267 = vld [vmem:[%s1 + $0x740] sm:$0xff]
    %v268 = vld [vmem:[%s1 + $0x748] sm:$0xff]
    %v269 = vld [vmem:[%s1 + $0x750] sm:$0xff]
    %v270 = vld [vmem:[%s1 + $0x758] sm:$0xff]
    %v271 = vld [vmem:[%s1 + $0x760] sm:$0xff]
    %v272 = vld [vmem:[%s1 + $0x768] sm:$0xff]
    %v273 = vld [vmem:[%s1 + $0x770] sm:$0xff]
    %v274 = vld [vmem:[%s1 + $0x778] sm:$0xff]
    %v275 = vld [vmem:[%s1 + $0x780] sm:$0xff]
    %v276 = vld [vmem:[%s1 + $0x788] sm:$0xff]
    %v277 = vld [vmem:[%s1 + $0x790] sm:$0xff]
    %v278 = vld [vmem:[%s1 + $0x798] sm:$0xff]
    %v279 = vld [vmem:[%s1 + $0x7a0] sm:$0xff]
    %v280 = vld [vmem:[%s1 + $0x7a8] sm:$0xff]
    %v281 = vld [vmem:[%s1 + $0x7b0] sm:$0xff]
    %v282 = vld [vmem:[%s1 + $0x7b8] sm:$0xff]
    %v283 = vld [vmem:[%s1 + $0x7c0] sm:$0xff]
    %v284 = vld [vmem:[%s1 + $0x7c8] sm:$0xff]
    %v285 = vld [vmem:[%s1 + $0x7d0] sm:$0xff]
    %v286 = vld [vmem:[%s1 + $0x7d8] sm:$0xff]
    %v287 = vld [vmem:[%s1 + $0x7e0] sm:$0xff]
    %v288 = vld [vmem:[%s1 + $0x7e8] sm:$0xff]
    %v289 = vld [vmem:[%s1 + $0x7f0] sm:$0xff]
    %v290 = vld [vmem:[%s1 + $0x7f8] sm:$0xff]
    %v291 = vld [vmem:[%s1 + $0x800] sm:$0xff]
    %v292 = vld [vmem:[%s1 + $0x808] sm:$0xff]
    %v293 = vld [vmem:[%s1 + $0x810] sm:$0xff]
    %v294 = vld [vmem:[%s1 + $0x818] sm:$0xff]
    %v295 = vld [vmem:[%s1 + $0x820] sm:$0xff]
    %v296 = vld [vmem:[%s1 + $0x828] sm:$0xff]
    %v297 = vld [vmem:[%s1 + $0x830] sm:$0xff]
    %v298 = vld [vmem:[%s1 + $0x838] sm:$0xff]
    %v299 = vld [vmem:[%s1 + $0x840] sm:$0xff]
    %v300 = vld [vmem:[%s1 + $0x848] sm:$0xff]
    %v301 = vld [vmem:[%s1 + $0x850] sm:$0xff]
    %v302 = vld [vmem:[%s1 + $0x858] sm:$0xff]
    %v303 = vld [vmem:[%s1 + $0x860] sm:$0xff]
    %v304 = vld [vmem:[%s1 + $0x868] sm:$0xff]
    %v305 = vld [vmem:[%s1 + $0x870] sm:$0xff]
    %v306 = vld [vmem:[%s1 + $0x878] sm:$0xff]
    %v307 = vld [vmem:[%s1 + $0x880] sm:$0xff]
    %v308 = vld [vmem:[%s1 + $0x888] sm:$0xff]
    %v309 = vld [vmem:[%s1 + $0x890] sm:$0xff]
    %v310 = vld [vmem:[%s1 + $0x898] sm:$0xff]
    %v311 = vld [vmem:[%s1 + $0x8a0] sm:$0xff]
    %v312 = vld [vmem:[%s1 + $0x8a8] sm:$0xff]
    %v313 = vld [vmem:[%s1 + $0x8b0] sm:$0xff]
    %v314 = vld [vmem:[%s1 + $0x8b8] sm:$0xff]
    %v315 = vld [vmem:[%s1 + $0x8c0] sm:$0xff]
    %v316 = vld [vmem:[%s1 + $0x8c8] sm:$0xff]
    %v317 = vld [vmem:[%s1 + $0x8d0] sm:$0xff]
    %v318 = vld [vmem:[%s1 + $0x8d8] sm:$0xff]
    %v319 = vld [vmem:[%s1 + $0x8e0] sm:$0xff]
    %v320 = vld [vmem:[%s1 + $0x8e8] sm:$0xff]
    %v321 = vld [vmem:[%s1 + $0x8f0] sm:$0xff]
    %v322 = vld [vmem:[%s1 + $0x8f8] sm:$0xff]
    %v323 = vld [vmem:[%s1 + $0x900] sm:$0xff]
    %v324 = vld [vmem:[%s1 + $0x908] sm:$0xff]
    %v325 = vld [vmem:[%s1 + $0x910] sm:$0xff]
    %v326 = vld [vmem:[%s1 + $0x918] sm:$0xff]
    %v327 = vld [vmem:[%s1 + $0x920] sm:$0xff]
    %v328 = vld [vmem:[%s1 + $0x928] sm:$0xff]
    %v329 = vld [vmem:[%s1 + $0x930] sm:$0xff]
    %v330 = vld [vmem:[%s1 + $0x938] sm:$0xff]
    %v331 = vld [vmem:[%s1 + $0x940] sm:$0xff]
    %v332 = vld [vmem:[%s1 + $0x948] sm:$0xff]
    %v333 = vld [vmem:[%s1 + $0x950] sm:$0xff]
    %v334 = vld [vmem:[%s1 + $0x958] sm:$0xff]
    %v335 = vld [vmem:[%s1 + $0x960] sm:$0xff]
    %v336 = vld [vmem:[%s1 + $0x968] sm:$0xff]
    %v337 = vld [vmem:[%s1 + $0x970] sm:$0xff]
    %v338 = vld [vmem:[%s1 + $0x978] sm:$0xff]
    %v339 = vld [vmem:[%s1 + $0x980] sm:$0xff]
    %v340 = vld [vmem:[%s1 + $0x988] sm:$0xff]
    %v341 = vld [vmem:[%s1 + $0x990] sm:$0xff]
    %v342 = vld [vmem:[%s1 + $0x998] sm:$0xff]
    %v343 = vld [vmem:[%s1 + $0x9a0] sm:$0xff]
    %v344 = vld [vmem:[%s1 + $0x9a8] sm:$0xff]
    %v345 = vld [vmem:[%s1 + $0x9b0] sm:$0xff]
    %v346 = vld [vmem:[%s1 + $0x9b8] sm:$0xff]
    %v347 = vld [vmem:[%s1 + $0x9c0] sm:$0xff]
    %v348 = vld [vmem:[%s1 + $0x9c8] sm:$0xff]
    %v349 = vld [vmem:[%s1 + $0x9d0] sm:$0xff]
    %v350 = vld [vmem:[%s1 + $0x9d8] sm:$0xff]
    %v351 = vld [vmem:[%s1 + $0x9e0] sm:$0xff]
    %v352 = vld [vmem:[%s1 + $0x9e8] sm:$0xff]
    %v353 = vld [vmem:[%s1 + $0x9f0] sm:$0xff]
    %v354 = vld [vmem:[%s1 + $0x9f8] sm:$0xff]
    %v355 = vld [vmem:[%s1 + $0xa00] sm:$0xff]
    %v356 = vld [vmem:[%s1 + $0xa08] sm:$0xff]
    %v357 = vld [vmem:[%s1 + $0xa10] sm:$0xff]
    %v358 = vld [vmem:[%s1 + $0xa18] sm:$0xff]
    %v359 = vld [vmem:[%s1 + $0xa20] sm:$0xff]
    %v360 = vld [vmem:[%s1 + $0xa28] sm:$0xff]
    %v361 = vld [vmem:[%s1 + $0xa30] sm:$0xff]
    %v362 = vld [vmem:[%s1 + $0xa38] sm:$0xff]
    %v363 = vld [vmem:[%s1 + $0xa40] sm:$0xff]
    %v364 = vld [vmem:[%s1 + $0xa48] sm:$0xff]
    %v365 = vld [vmem:[%s1 + $0xa50] sm:$0xff]
    %v366 = vld [vmem:[%s1 + $0xa58] sm:$0xff]
    %v367 = vld [vmem:[%s1 + $0xa60] sm:$0xff]
    %v368 = vld [vmem:[%s1 + $0xa68] sm:$0xff]
    %v369 = vld [vmem:[%s1 + $0xa70] sm:$0xff]
    %v370 = vld [vmem:[%s1 + $0xa78] sm:$0xff]
    %v371 = vand.u32 2147483647, %v35
    %v372 = vand.u32 2147483647, %v36
    %v373 = vand.u32 2147483647, %v37
    %v374 = vand.u32 2147483647, %v38
    %v375 = vand.u32 2147483647, %v39
    %v376 = vand.u32 2147483647, %v40
    %v377 = vand.u32 2147483647, %v41
    %v378 = vand.u32 2147483647, %v42
    %v379 = vand.u32 2147483647, %v43
    %v380 = vand.u32 2147483647, %v44
    %v381 = vand.u32 2147483647, %v45
    %v382 = vand.u32 2147483647, %v46
    %v383 = vand.u32 2147483647, %v47
    %v384 = vand.u32 2147483647, %v48
    %v385 = vand.u32 2147483647, %v49
    %v386 = vand.u32 2147483647, %v50
    %v387 = vand.u32 2147483647, %v51
    %v388 = vand.u32 2147483647, %v52
    %v389 = vand.u32 2147483647, %v53
    %v390 = vand.u32 2147483647, %v54
    %v391 = vand.u32 2147483647, %v55
    %v392 = vand.u32 2147483647, %v56
    %v393 = vand.u32 2147483647, %v57
    %v394 = vand.u32 2147483647, %v58
    %v395 = vand.u32 2147483647, %v59
    %v396 = vand.u32 2147483647, %v60
    %v397 = vand.u32 2147483647, %v61
    %v398 = vand.u32 2147483647, %v62
    %v399 = vand.u32 2147483647, %v63
    %v400 = vand.u32 2147483647, %v64
    %v401 = vand.u32 2147483647, %v65
    %v402 = vand.u32 2147483647, %v66
    %v403 = vand.u32 2147483647, %v67
    %v404 = vand.u32 2147483647, %v68
    %v405 = vand.u32 2147483647, %v69
    %v406 = vand.u32 2147483647, %v70
    %v407 = vand.u32 2147483647, %v71
    %v408 = vand.u32 2147483647, %v72
    %v409 = vand.u32 2147483647, %v73
    %v410 = vand.u32 2147483647, %v74
    %v411 = vand.u32 2147483647, %v75
    %v412 = vand.u32 2147483647, %v76
    %v413 = vand.u32 2147483647, %v77
    %v414 = vand.u32 2147483647, %v78
    %v415 = vand.u32 2147483647, %v79
    %v416 = vand.u32 2147483647, %v80
    %v417 = vand.u32 2147483647, %v81
    %v418 = vand.u32 2147483647, %v82
    %v419 = vand.u32 2147483647, %v83
    %v420 = vand.u32 2147483647, %v84
    %v421 = vand.u32 2147483647, %v85
    %v422 = vand.u32 2147483647, %v86
    %v423 = vand.u32 2147483647, %v87
    %v424 = vand.u32 2147483647, %v88
    %v425 = vand.u32 2147483647, %v89
    %v426 = vand.u32 2147483647, %v90
    %v427 = vand.u32 2147483647, %v91
    %v428 = vand.u32 2147483647, %v92
    %v429 = vand.u32 2147483647, %v93
    %v430 = vand.u32 2147483647, %v94
    %v431 = vand.u32 2147483647, %v95
    %v432 = vand.u32 2147483647, %v96
    %v433 = vand.u32 2147483647, %v97
    %v434 = vand.u32 2147483647, %v98
    %v435 = vand.u32 2147483647, %v99
    %v436 = vand.u32 2147483647, %v100
    %v437 = vand.u32 2147483647, %v101
    %v438 = vand.u32 2147483647, %v102
    %v439 = vand.u32 2147483647, %v103
    %v440 = vand.u32 2147483647, %v104
    %v441 = vand.u32 2147483647, %v105
    %v442 = vand.u32 2147483647, %v106
    %v443 = vand.u32 2147483647, %v107
    %v444 = vand.u32 2147483647, %v108
    %v445 = vand.u32 2147483647, %v109
    %v446 = vand.u32 2147483647, %v110
    %v447 = vand.u32 2147483647, %v111
    %v448 = vand.u32 2147483647, %v112
    %v449 = vand.u32 2147483647, %v113
    %v450 = vand.u32 2147483647, %v114
    %v451 = vand.u32 2147483647, %v115
    %v452 = vand.u32 2147483647, %v116
    %v453 = vand.u32 2147483647, %v117
    %v454 = vand.u32 2147483647, %v118
    %v455 = vand.u32 2147483647, %v119
    %v456 = vand.u32 2147483647, %v120
    %v457 = vand.u32 2147483647, %v121
    %v458 = vand.u32 2147483647, %v122
    %v459 = vand.u32 2147483647, %v123
    %v460 = vand.u32 2147483647, %v124
    %v461 = vand.u32 2147483647, %v125
    %v462 = vand.u32 2147483647, %v126
    %v463 = vand.u32 2147483647, %v127
    %v464 = vand.u32 2147483647, %v128
    %v465 = vand.u32 2147483647, %v129
    %v466 = vand.u32 2147483647, %v130
    %v467 = vand.u32 2147483647, %v131
    %v468 = vand.u32 2147483647, %v132
    %v469 = vand.u32 2147483647, %v133
    %v470 = vand.u32 2147483647, %v134
    %v471 = vand.u32 2147483647, %v135
    %v472 = vand.u32 2147483647, %v136
    %v473 = vand.u32 2147483647, %v137
    %v474 = vand.u32 2147483647, %v138
    %v475 = vand.u32 2147483647, %v139
    %v476 = vand.u32 2147483647, %v140
    %v477 = vand.u32 2147483647, %v141
    %v478 = vand.u32 2147483647, %v142
    %v479 = vand.u32 2147483647, %v143
    %v480 = vand.u32 2147483647, %v144
    %v481 = vand.u32 2147483647, %v145
    %v482 = vand.u32 2147483647, %v146
    %v483 = vand.u32 2147483647, %v147
    %v484 = vand.u32 2147483647, %v148
    %v485 = vand.u32 2147483647, %v149
    %v486 = vand.u32 2147483647, %v150
    %v487 = vand.u32 2147483647, %v151
    %v488 = vand.u32 2147483647, %v152
    %v489 = vand.u32 2147483647, %v153
    %v490 = vand.u32 2147483647, %v154
    %v491 = vand.u32 2147483647, %v155
    %v492 = vand.u32 2147483647, %v156
    %v493 = vand.u32 2147483647, %v157
    %v494 = vand.u32 2147483647, %v158
    %v495 = vand.u32 2147483647, %v159
    %v496 = vand.u32 2147483647, %v160
    %v497 = vand.u32 2147483647, %v161
    %v498 = vand.u32 2147483647, %v162
    %v499 = vand.u32 2147483647, %v163
    %v500 = vand.u32 2147483647, %v164
    %v501 = vand.u32 2147483647, %v165
    %v502 = vand.u32 2147483647, %v166
    %v503 = vand.u32 2147483647, %v167
    %v504 = vand.u32 2147483647, %v168
    %v505 = vand.u32 2147483647, %v169
    %v506 = vand.u32 2147483647, %v170
    %v507 = vand.u32 2147483647, %v171
    %v508 = vand.u32 2147483647, %v172
    %v509 = vand.u32 2147483647, %v173
    %v510 = vand.u32 2147483647, %v174
    %v511 = vand.u32 2147483647, %v175
    %v512 = vand.u32 2147483647, %v176
    %v513 = vand.u32 2147483647, %v177
    %v514 = vand.u32 2147483647, %v178
    %v515 = vand.u32 2147483647, %v179
    %v516 = vand.u32 2147483647, %v180
    %v517 = vand.u32 2147483647, %v181
    %v518 = vand.u32 2147483647, %v182
    %v519 = vand.u32 2147483647, %v183
    %v520 = vand.u32 2147483647, %v184
    %v521 = vand.u32 2147483647, %v185
    %v522 = vand.u32 2147483647, %v186
    %v523 = vand.u32 2147483647, %v187
    %v524 = vand.u32 2147483647, %v188
    %v525 = vand.u32 2147483647, %v189
    %v526 = vand.u32 2147483647, %v190
    %v527 = vand.u32 2147483647, %v191
    %v528 = vand.u32 2147483647, %v192
    %v529 = vand.u32 2147483647, %v193
    %v530 = vand.u32 2147483647, %v194
    %v531 = vand.u32 2147483647, %v195
    %v532 = vand.u32 2147483647, %v196
    %v533 = vand.u32 2147483647, %v197
    %v534 = vand.u32 2147483647, %v198
    %v535 = vand.u32 2147483647, %v199
    %v536 = vand.u32 2147483647, %v200
    %v537 = vand.u32 2147483647, %v201
    %v538 = vand.u32 2147483647, %v202
    %v539 = vand.u32 2147483647, %v203
    %v540 = vand.u32 2147483647, %v204
    %v541 = vand.u32 2147483647, %v205
    %v542 = vand.u32 2147483647, %v206
    %v543 = vand.u32 2147483647, %v207
    %v544 = vand.u32 2147483647, %v208
    %v545 = vand.u32 2147483647, %v209
    %v546 = vand.u32 2147483647, %v210
    %v547 = vand.u32 2147483647, %v211
    %v548 = vand.u32 2147483647, %v212
    %v549 = vand.u32 2147483647, %v213
    %v550 = vand.u32 2147483647, %v214
    %v551 = vand.u32 2147483647, %v215
    %v552 = vand.u32 2147483647, %v216
    %v553 = vand.u32 2147483647, %v217
    %v554 = vand.u32 2147483647, %v218
    %v555 = vand.u32 2147483647, %v219
    %v556 = vand.u32 2147483647, %v220
    %v557 = vand.u32 2147483647, %v221
    %v558 = vand.u32 2147483647, %v222
    %v559 = vand.u32 2147483647, %v223
    %v560 = vand.u32 2147483647, %v224
    %v561 = vand.u32 2147483647, %v225
    %v562 = vand.u32 2147483647, %v226
    %v563 = vand.u32 2147483647, %v227
    %v564 = vand.u32 2147483647, %v228
    %v565 = vand.u32 2147483647, %v229
    %v566 = vand.u32 2147483647, %v230
    %v567 = vand.u32 2147483647, %v231
    %v568 = vand.u32 2147483647, %v232
    %v569 = vand.u32 2147483647, %v233
    %v570 = vand.u32 2147483647, %v234
    %v571 = vand.u32 2147483647, %v235
    %v572 = vand.u32 2147483647, %v236
    %v573 = vand.u32 2147483647, %v237
    %v574 = vand.u32 2147483647, %v238
    %v575 = vand.u32 2147483647, %v239
    %v576 = vand.u32 2147483647, %v240
    %v577 = vand.u32 2147483647, %v241
    %v578 = vand.u32 2147483647, %v242
    %v579 = vand.u32 2147483647, %v243
    %v580 = vand.u32 2147483647, %v244
    %v581 = vand.u32 2147483647, %v245
    %v582 = vand.u32 2147483647, %v246
    %v583 = vand.u32 2147483647, %v247
    %v584 = vand.u32 2147483647, %v248
    %v585 = vand.u32 2147483647, %v249
    %v586 = vand.u32 2147483647, %v250
    %v587 = vand.u32 2147483647, %v251
    %v588 = vand.u32 2147483647, %v252
    %v589 = vand.u32 2147483647, %v253
    %v590 = vand.u32 2147483647, %v254
    %v591 = vand.u32 2147483647, %v255
    %v592 = vand.u32 2147483647, %v256
    %v593 = vand.u32 2147483647, %v257
    %v594 = vand.u32 2147483647, %v258
    %v595 = vand.u32 2147483647, %v259
    %v596 = vand.u32 2147483647, %v260
    %v597 = vand.u32 2147483647, %v261
    %v598 = vand.u32 2147483647, %v262
    %v599 = vand.u32 2147483647, %v263
    %v600 = vand.u32 2147483647, %v264
    %v601 = vand.u32 2147483647, %v265
    %v602 = vand.u32 2147483647, %v266
    %v603 = vand.u32 2147483647, %v267
    %v604 = vand.u32 2147483647, %v268
    %v605 = vand.u32 2147483647, %v269
    %v606 = vand.u32 2147483647, %v270
    %v607 = vand.u32 2147483647, %v271
    %v608 = vand.u32 2147483647, %v272
    %v609 = vand.u32 2147483647, %v273
    %v610 = vand.u32 2147483647, %v274
    %v611 = vand.u32 2147483647, %v275
    %v612 = vand.u32 2147483647, %v276
    %v613 = vand.u32 2147483647, %v277
    %v614 = vand.u32 2147483647, %v278
    %v615 = vand.u32 2147483647, %v279
    %v616 = vand.u32 2147483647, %v280
    %v617 = vand.u32 2147483647, %v281
    %v618 = vand.u32 2147483647, %v282
    %v619 = vand.u32 2147483647, %v283
    %v620 = vand.u32 2147483647, %v284
    %v621 = vand.u32 2147483647, %v285
    %v622 = vand.u32 2147483647, %v286
    %v623 = vand.u32 2147483647, %v287
    %v624 = vand.u32 2147483647, %v288
    %v625 = vand.u32 2147483647, %v289
    %v626 = vand.u32 2147483647, %v290
    %v627 = vand.u32 2147483647, %v291
    %v628 = vand.u32 2147483647, %v292
    %v629 = vand.u32 2147483647, %v293
    %v630 = vand.u32 2147483647, %v294
    %v631 = vand.u32 2147483647, %v295
    %v632 = vand.u32 2147483647, %v296
    %v633 = vand.u32 2147483647, %v297
    %v634 = vand.u32 2147483647, %v298
    %v635 = vand.u32 2147483647, %v299
    %v636 = vand.u32 2147483647, %v300
    %v637 = vand.u32 2147483647, %v301
    %v638 = vand.u32 2147483647, %v302
    %v639 = vand.u32 2147483647, %v303
    %v640 = vand.u32 2147483647, %v304
    %v641 = vand.u32 2147483647, %v305
    %v642 = vand.u32 2147483647, %v306
    %v643 = vand.u32 2147483647, %v307
    %v644 = vand.u32 2147483647, %v308
    %v645 = vand.u32 2147483647, %v309
    %v646 = vand.u32 2147483647, %v310
    %v647 = vand.u32 2147483647, %v311
    %v648 = vand.u32 2147483647, %v312
    %v649 = vand.u32 2147483647, %v313
    %v650 = vand.u32 2147483647, %v314
    %v651 = vand.u32 2147483647, %v315
    %v652 = vand.u32 2147483647, %v316
    %v653 = vand.u32 2147483647, %v317
    %v654 = vand.u32 2147483647, %v318
    %v655 = vand.u32 2147483647, %v319
    %v656 = vand.u32 2147483647, %v320
    %v657 = vand.u32 2147483647, %v321
    %v658 = vand.u32 2147483647, %v322
    %v659 = vand.u32 2147483647, %v323
    %v660 = vand.u32 2147483647, %v324
    %v661 = vand.u32 2147483647, %v325
    %v662 = vand.u32 2147483647, %v326
    %v663 = vand.u32 2147483647, %v327
    %v664 = vand.u32 2147483647, %v328
    %v665 = vand.u32 2147483647, %v329
    %v666 = vand.u32 2147483647, %v330
    %v667 = vand.u32 2147483647, %v331
    %v668 = vand.u32 2147483647, %v332
    %v669 = vand.u32 2147483647, %v333
    %v670 = vand.u32 2147483647, %v334
    %v671 = vand.u32 2147483647, %v335
    %v672 = vand.u32 2147483647, %v336
    %v673 = vand.u32 2147483647, %v337
    %v674 = vand.u32 2147483647, %v338
    %v675 = vand.u32 2147483647, %v339
    %v676 = vand.u32 2147483647, %v340
    %v677 = vand.u32 2147483647, %v341
    %v678 = vand.u32 2147483647, %v342
    %v679 = vand.u32 2147483647, %v343
    %v680 = vand.u32 2147483647, %v344
    %v681 = vand.u32 2147483647, %v345
    %v682 = vand.u32 2147483647, %v346
    %v683 = vand.u32 2147483647, %v347
    %v684 = vand.u32 2147483647, %v348
    %v685 = vand.u32 2147483647, %v349
    %v686 = vand.u32 2147483647, %v350
    %v687 = vand.u32 2147483647, %v351
    %v688 = vand.u32 2147483647, %v352
    %v689 = vand.u32 2147483647, %v353
    %v690 = vand.u32 2147483647, %v354
    %v691 = vand.u32 2147483647, %v355
    %v692 = vand.u32 2147483647, %v356
    %v693 = vand.u32 2147483647, %v357
    %v694 = vand.u32 2147483647, %v358
    %v695 = vand.u32 2147483647, %v359
    %v696 = vand.u32 2147483647, %v360
    %v697 = vand.u32 2147483647, %v361
    %v698 = vand.u32 2147483647, %v362
    %v699 = vand.u32 2147483647, %v363
    %v700 = vand.u32 2147483647, %v364
    %v701 = vand.u32 2147483647, %v365
    %v702 = vand.u32 2147483647, %v366
    %v703 = vand.u32 2147483647, %v367
    %v704 = vand.u32 2147483647, %v368
    %v705 = vand.u32 2147483647, %v369
    %v706 = vand.u32 2147483647, %v370
    %v707 = vmul.f32 %v35, %v371
    %v708 = vmul.f32 %v36, %v372
    %v709 = vmul.f32 %v37, %v373
    %v710 = vmul.f32 %v38, %v374
    %v711 = vmul.f32 %v39, %v375
    %v712 = vmul.f32 %v40, %v376
    %v713 = vmul.f32 %v41, %v377
    %v714 = vmul.f32 %v42, %v378
    %v715 = vmul.f32 %v43, %v379
    %v716 = vmul.f32 %v44, %v380
    %v717 = vmul.f32 %v45, %v381
    %v718 = vmul.f32 %v46, %v382
    %v719 = vmul.f32 %v47, %v383
    %v720 = vmul.f32 %v48, %v384
    %v721 = vmul.f32 %v49, %v385
    %v722 = vmul.f32 %v50, %v386
    %v723 = vmul.f32 %v51, %v387
    %v724 = vmul.f32 %v52, %v388
    %v725 = vmul.f32 %v53, %v389
    %v726 = vmul.f32 %v54, %v390
    %v727 = vmul.f32 %v55, %v391
    %v728 = vmul.f32 %v56, %v392
    %v729 = vmul.f32 %v57, %v393
    %v730 = vmul.f32 %v58, %v394
    %v731 = vmul.f32 %v59, %v395
    %v732 = vmul.f32 %v60, %v396
    %v733 = vmul.f32 %v61, %v397
    %v734 = vmul.f32 %v62, %v398
    %v735 = vmul.f32 %v63, %v399
    %v736 = vmul.f32 %v64, %v400
    %v737 = vmul.f32 %v65, %v401
    %v738 = vmul.f32 %v66, %v402
    %v739 = vmul.f32 %v67, %v403
    %v740 = vmul.f32 %v68, %v404
    %v741 = vmul.f32 %v69, %v405
    %v742 = vmul.f32 %v70, %v406
    %v743 = vmul.f32 %v71, %v407
    %v744 = vmul.f32 %v72, %v408
    %v745 = vmul.f32 %v73, %v409
    %v746 = vmul.f32 %v74, %v410
    %v747 = vmul.f32 %v75, %v411
    %v748 = vmul.f32 %v76, %v412
    %v749 = vmul.f32 %v77, %v413
    %v750 = vmul.f32 %v78, %v414
    %v751 = vmul.f32 %v79, %v415
    %v752 = vmul.f32 %v80, %v416
    %v753 = vmul.f32 %v81, %v417
    %v754 = vmul.f32 %v82, %v418
    %v755 = vmul.f32 %v83, %v419
    %v756 = vmul.f32 %v84, %v420
    %v757 = vmul.f32 %v85, %v421
    %v758 = vmul.f32 %v86, %v422
    %v759 = vmul.f32 %v87, %v423
    %v760 = vmul.f32 %v88, %v424
    %v761 = vmul.f32 %v89, %v425
    %v762 = vmul.f32 %v90, %v426
    %v763 = vmul.f32 %v91, %v427
    %v764 = vmul.f32 %v92, %v428
    %v765 = vmul.f32 %v93, %v429
    %v766 = vmul.f32 %v94, %v430
    %v767 = vmul.f32 %v95, %v431
    %v768 = vmul.f32 %v96, %v432
    %v769 = vmul.f32 %v97, %v433
    %v770 = vmul.f32 %v98, %v434
    %v771 = vmul.f32 %v99, %v435
    %v772 = vmul.f32 %v100, %v436
    %v773 = vmul.f32 %v101, %v437
    %v774 = vmul.f32 %v102, %v438
    %v775 = vmul.f32 %v103, %v439
    %v776 = vmul.f32 %v104, %v440
    %v777 = vmul.f32 %v105, %v441
    %v778 = vmul.f32 %v106, %v442
    %v779 = vmul.f32 %v107, %v443
    %v780 = vmul.f32 %v108, %v444
    %v781 = vmul.f32 %v109, %v445
    %v782 = vmul.f32 %v110, %v446
    %v783 = vmul.f32 %v111, %v447
    %v784 = vmul.f32 %v112, %v448
    %v785 = vmul.f32 %v113, %v449
    %v786 = vmul.f32 %v114, %v450
    %v787 = vmul.f32 %v115, %v451
    %v788 = vmul.f32 %v116, %v452
    %v789 = vmul.f32 %v117, %v453
    %v790 = vmul.f32 %v118, %v454
    %v791 = vmul.f32 %v119, %v455
    %v792 = vmul.f32 %v120, %v456
    %v793 = vmul.f32 %v121, %v457
    %v794 = vmul.f32 %v122, %v458
    %v795 = vmul.f32 %v123, %v459
    %v796 = vmul.f32 %v124, %v460
    %v797 = vmul.f32 %v125, %v461
    %v798 = vmul.f32 %v126, %v462
    %v799 = vmul.f32 %v127, %v463
    %v800 = vmul.f32 %v128, %v464
    %v801 = vmul.f32 %v129, %v465
    %v802 = vmul.f32 %v130, %v466
    %v803 = vmul.f32 %v131, %v467
    %v804 = vmul.f32 %v132, %v468
    %v805 = vmul.f32 %v133, %v469
    %v806 = vmul.f32 %v134, %v470
    %v807 = vmul.f32 %v135, %v471
    %v808 = vmul.f32 %v136, %v472
    %v809 = vmul.f32 %v137, %v473
    %v810 = vmul.f32 %v138, %v474
    %v811 = vmul.f32 %v139, %v475
    %v812 = vmul.f32 %v140, %v476
    %v813 = vmul.f32 %v141, %v477
    %v814 = vmul.f32 %v142, %v478
    %v815 = vmul.f32 %v143, %v479
    %v816 = vmul.f32 %v144, %v480
    %v817 = vmul.f32 %v145, %v481
    %v818 = vmul.f32 %v146, %v482
    %v819 = vmul.f32 %v147, %v483
    %v820 = vmul.f32 %v148, %v484
    %v821 = vmul.f32 %v149, %v485
    %v822 = vmul.f32 %v150, %v486
    %v823 = vmul.f32 %v151, %v487
    %v824 = vmul.f32 %v152, %v488
    %v825 = vmul.f32 %v153, %v489
    %v826 = vmul.f32 %v154, %v490
    %v827 = vmul.f32 %v155, %v491
    %v828 = vmul.f32 %v156, %v492
    %v829 = vmul.f32 %v157, %v493
    %v830 = vmul.f32 %v158, %v494
    %v831 = vmul.f32 %v159, %v495
    %v832 = vmul.f32 %v160, %v496
    %v833 = vmul.f32 %v161, %v497
    %v834 = vmul.f32 %v162, %v498
    %v835 = vmul.f32 %v163, %v499
    %v836 = vmul.f32 %v164, %v500
    %v837 = vmul.f32 %v165, %v501
    %v838 = vmul.f32 %v166, %v502
    %v839 = vmul.f32 %v167, %v503
    %v840 = vmul.f32 %v168, %v504
    %v841 = vmul.f32 %v169, %v505
    %v842 = vmul.f32 %v170, %v506
    %v843 = vmul.f32 %v171, %v507
    %v844 = vmul.f32 %v172, %v508
    %v845 = vmul.f32 %v173, %v509
    %v846 = vmul.f32 %v174, %v510
    %v847 = vmul.f32 %v175, %v511
    %v848 = vmul.f32 %v176, %v512
    %v849 = vmul.f32 %v177, %v513
    %v850 = vmul.f32 %v178, %v514
    %v851 = vmul.f32 %v179, %v515
    %v852 = vmul.f32 %v180, %v516
    %v853 = vmul.f32 %v181, %v517
    %v854 = vmul.f32 %v182, %v518
    %v855 = vmul.f32 %v183, %v519
    %v856 = vmul.f32 %v184, %v520
    %v857 = vmul.f32 %v185, %v521
    %v858 = vmul.f32 %v186, %v522
    %v859 = vmul.f32 %v187, %v523
    %v860 = vmul.f32 %v188, %v524
    %v861 = vmul.f32 %v189, %v525
    %v862 = vmul.f32 %v190, %v526
    %v863 = vmul.f32 %v191, %v527
    %v864 = vmul.f32 %v192, %v528
    %v865 = vmul.f32 %v193, %v529
    %v866 = vmul.f32 %v194, %v530
    %v867 = vmul.f32 %v195, %v531
    %v868 = vmul.f32 %v196, %v532
    %v869 = vmul.f32 %v197, %v533
    %v870 = vmul.f32 %v198, %v534
    %v871 = vmul.f32 %v199, %v535
    %v872 = vmul.f32 %v200, %v536
    %v873 = vmul.f32 %v201, %v537
    %v874 = vmul.f32 %v202, %v538
    %v875 = vmul.f32 %v203, %v539
    %v876 = vmul.f32 %v204, %v540
    %v877 = vmul.f32 %v205, %v541
    %v878 = vmul.f32 %v206, %v542
    %v879 = vmul.f32 %v207, %v543
    %v880 = vmul.f32 %v208, %v544
    %v881 = vmul.f32 %v209, %v545
    %v882 = vmul.f32 %v210, %v546
    %v883 = vmul.f32 %v211, %v547
    %v884 = vmul.f32 %v212, %v548
    %v885 = vmul.f32 %v213, %v549
    %v886 = vmul.f32 %v214, %v550
    %v887 = vmul.f32 %v215, %v551
    %v888 = vmul.f32 %v216, %v552
    %v889 = vmul.f32 %v217, %v553
    %v890 = vmul.f32 %v218, %v554
    %v891 = vmul.f32 %v219, %v555
    %v892 = vmul.f32 %v220, %v556
    %v893 = vmul.f32 %v221, %v557
    %v894 = vmul.f32 %v222, %v558
    %v895 = vmul.f32 %v223, %v559
    %v896 = vmul.f32 %v224, %v560
    %v897 = vmul.f32 %v225, %v561
    %v898 = vmul.f32 %v226, %v562
    %v899 = vmul.f32 %v227, %v563
    %v900 = vmul.f32 %v228, %v564
    %v901 = vmul.f32 %v229, %v565
    %v902 = vmul.f32 %v230, %v566
    %v903 = vmul.f32 %v231, %v567
    %v904 = vmul.f32 %v232, %v568
    %v905 = vmul.f32 %v233, %v569
    %v906 = vmul.f32 %v234, %v570
    %v907 = vmul.f32 %v235, %v571
    %v908 = vmul.f32 %v236, %v572
    %v909 = vmul.f32 %v237, %v573
    %v910 = vmul.f32 %v238, %v574
    %v911 = vmul.f32 %v239, %v575
    %v912 = vmul.f32 %v240, %v576
    %v913 = vmul.f32 %v241, %v577
    %v914 = vmul.f32 %v242, %v578
    %v915 = vmul.f32 %v243, %v579
    %v916 = vmul.f32 %v244, %v580
    %v917 = vmul.f32 %v245, %v581
    %v918 = vmul.f32 %v246, %v582
    %v919 = vmul.f32 %v247, %v583
    %v920 = vmul.f32 %v248, %v584
    %v921 = vmul.f32 %v249, %v585
    %v922 = vmul.f32 %v250, %v586
    %v923 = vmul.f32 %v251, %v587
    %v924 = vmul.f32 %v252, %v588
    %v925 = vmul.f32 %v253, %v589
    %v926 = vmul.f32 %v254, %v590
    %v927 = vmul.f32 %v255, %v591
    %v928 = vmul.f32 %v256, %v592
    %v929 = vmul.f32 %v257, %v593
    %v930 = vmul.f32 %v258, %v594
    %v931 = vmul.f32 %v259, %v595
    %v932 = vmul.f32 %v260, %v596
    %v933 = vmul.f32 %v261, %v597
    %v934 = vmul.f32 %v262, %v598
    %v935 = vmul.f32 %v263, %v599
    %v936 = vmul.f32 %v264, %v600
    %v937 = vmul.f32 %v265, %v601
    %v938 = vmul.f32 %v266, %v602
    %v939 = vmul.f32 %v267, %v603
    %v940 = vmul.f32 %v268, %v604
    %v941 = vmul.f32 %v269, %v605
    %v942 = vmul.f32 %v270, %v606
    %v943 = vmul.f32 %v271, %v607
    %v944 = vmul.f32 %v272, %v608
    %v945 = vmul.f32 %v273, %v609
    %v946 = vmul.f32 %v274, %v610
    %v947 = vmul.f32 %v275, %v611
    %v948 = vmul.f32 %v276, %v612
    %v949 = vmul.f32 %v277, %v613
    %v950 = vmul.f32 %v278, %v614
    %v951 = vmul.f32 %v279, %v615
    %v952 = vmul.f32 %v280, %v616
    %v953 = vmul.f32 %v281, %v617
    %v954 = vmul.f32 %v282, %v618
    %v955 = vmul.f32 %v283, %v619
    %v956 = vmul.f32 %v284, %v620
    %v957 = vmul.f32 %v285, %v621
    %v958 = vmul.f32 %v286, %v622
    %v959 = vmul.f32 %v287, %v623
    %v960 = vmul.f32 %v288, %v624
    %v961 = vmul.f32 %v289, %v625
    %v962 = vmul.f32 %v290, %v626
    %v963 = vmul.f32 %v291, %v627
    %v964 = vmul.f32 %v292, %v628
    %v965 = vmul.f32 %v293, %v629
    %v966 = vmul.f32 %v294, %v630
    %v967 = vmul.f32 %v295, %v631
    %v968 = vmul.f32 %v296, %v632
    %v969 = vmul.f32 %v297, %v633
    %v970 = vmul.f32 %v298, %v634
    %v971 = vmul.f32 %v299, %v635
    %v972 = vmul.f32 %v300, %v636
    %v973 = vmul.f32 %v301, %v637
    %v974 = vmul.f32 %v302, %v638
    %v975 = vmul.f32 %v303, %v639
    %v976 = vmul.f32 %v304, %v640
    %v977 = vmul.f32 %v305, %v641
    %v978 = vmul.f32 %v306, %v642
    %v979 = vmul.f32 %v307, %v643
    %v980 = vmul.f32 %v308, %v644
    %v981 = vmul.f32 %v309, %v645
    %v982 = vmul.f32 %v310, %v646
    %v983 = vmul.f32 %v311, %v647
    %v984 = vmul.f32 %v312, %v648
    %v985 = vmul.f32 %v313, %v649
    %v986 = vmul.f32 %v314, %v650
    %v987 = vmul.f32 %v315, %v651
    %v988 = vmul.f32 %v316, %v652
    %v989 = vmul.f32 %v317, %v653
    %v990 = vmul.f32 %v318, %v654
    %v991 = vmul.f32 %v319, %v655
    %v992 = vmul.f32 %v320, %v656
    %v993 = vmul.f32 %v321, %v657
    %v994 = vmul.f32 %v322, %v658
    %v995 = vmul.f32 %v323, %v659
    %v996 = vmul.f32 %v324, %v660
    %v997 = vmul.f32 %v325, %v661
    %v998 = vmul.f32 %v326, %v662
    %v999 = vmul.f32 %v327, %v663
    %v1000 = vmul.f32 %v328, %v664
    %v1001 = vmul.f32 %v329, %v665
    %v1002 = vmul.f32 %v330, %v666
    %v1003 = vmul.f32 %v331, %v667
    %v1004 = vmul.f32 %v332, %v668
    %v1005 = vmul.f32 %v333, %v669
    %v1006 = vmul.f32 %v334, %v670
    %v1007 = vmul.f32 %v335, %v671
    %v1008 = vmul.f32 %v336, %v672
    %v1009 = vmul.f32 %v337, %v673
    %v1010 = vmul.f32 %v338, %v674
    %v1011 = vmul.f32 %v339, %v675
    %v1012 = vmul.f32 %v340, %v676
    %v1013 = vmul.f32 %v341, %v677
    %v1014 = vmul.f32 %v342, %v678
    %v1015 = vmul.f32 %v343, %v679
    %v1016 = vmul.f32 %v344, %v680
    %v1017 = vmul.f32 %v345, %v681
    %v1018 = vmul.f32 %v346, %v682
    %v1019 = vmul.f32 %v347, %v683
    %v1020 = vmul.f32 %v348, %v684
    %v1021 = vmul.f32 %v349, %v685
    %v1022 = vmul.f32 %v350, %v686
    %v1023 = vmul.f32 %v351, %v687
    %v1024 = vmul.f32 %v352, %v688
    %v1025 = vmul.f32 %v353, %v689
    %v1026 = vmul.f32 %v354, %v690
    %v1027 = vmul.f32 %v355, %v691
    %v1028 = vmul.f32 %v356, %v692
    %v1029 = vmul.f32 %v357, %v693
    %v1030 = vmul.f32 %v358, %v694
    %v1031 = vmul.f32 %v359, %v695
    %v1032 = vmul.f32 %v360, %v696
    %v1033 = vmul.f32 %v361, %v697
    %v1034 = vmul.f32 %v362, %v698
    %v1035 = vmul.f32 %v363, %v699
    %v1036 = vmul.f32 %v364, %v700
    %v1037 = vmul.f32 %v365, %v701
    %v1038 = vmul.f32 %v366, %v702
    %v1039 = vmul.f32 %v367, %v703
    %v1040 = vmul.f32 %v368, %v704
    %v1041 = vmul.f32 %v369, %v705
    %v1042 = vmul.f32 %v370, %v706
    %v1043 = vpack.c.bf16 %v28, %v28
    %v1044 = vpack.c.bf16 %v29, %v29
    %v1045 = vpack.c.bf16 %v30, %v30
    %v1046 = vpack.c.bf16 %v31, %v31
    %v1047 = vpack.c.bf16 %v32, %v32
    %v1048 = vpack.c.bf16 %v33, %v33
    %v1049 = vpack.c.bf16 %v34, %v34
    %v1050 = vpack.c.bf16 %v710, %v707
    %v1051 = vpack.c.bf16 %v711, %v708
    %v1052 = vpack.c.bf16 %v712, %v709
    %v1053 = vpack.c.bf16 %v716, %v713
    %v1054 = vpack.c.bf16 %v717, %v714
    %v1055 = vpack.c.bf16 %v718, %v715
    %v1056 = vpack.c.bf16 %v722, %v719
    %v1057 = vpack.c.bf16 %v723, %v720
    %v1058 = vpack.c.bf16 %v724, %v721
    %v1059 = vpack.c.bf16 %v728, %v725
    %v1060 = vpack.c.bf16 %v729, %v726
    %v1061 = vpack.c.bf16 %v730, %v727
    %v1062 = vpack.c.bf16 %v734, %v731
    %v1063 = vpack.c.bf16 %v735, %v732
    %v1064 = vpack.c.bf16 %v736, %v733
    %v1065 = vpack.c.bf16 %v740, %v737
    %v1066 = vpack.c.bf16 %v741, %v738
    %v1067 = vpack.c.bf16 %v742, %v739
    %v1068 = vpack.c.bf16 %v746, %v743
    %v1069 = vpack.c.bf16 %v747, %v744
    %v1070 = vpack.c.bf16 %v748, %v745
    %v1071 = vpack.c.bf16 %v752, %v749
    %v1072 = vpack.c.bf16 %v753, %v750
    %v1073 = vpack.c.bf16 %v754, %v751
    %v1074 = vpack.c.bf16 %v758, %v755
    %v1075 = vpack.c.bf16 %v759, %v756
    %v1076 = vpack.c.bf16 %v760, %v757
    %v1077 = vpack.c.bf16 %v764, %v761
    %v1078 = vpack.c.bf16 %v765, %v762
    %v1079 = vpack.c.bf16 %v766, %v763
    %v1080 = vpack.c.bf16 %v770, %v767
    %v1081 = vpack.c.bf16 %v771, %v768
    %v1082 = vpack.c.bf16 %v772, %v769
    %v1083 = vpack.c.bf16 %v776, %v773
    %v1084 = vpack.c.bf16 %v777, %v774
    %v1085 = vpack.c.bf16 %v778, %v775
    %v1086 = vpack.c.bf16 %v782, %v779
    %v1087 = vpack.c.bf16 %v783, %v780
    %v1088 = vpack.c.bf16 %v784, %v781
    %v1089 = vpack.c.bf16 %v788, %v785
    %v1090 = vpack.c.bf16 %v789, %v786
    %v1091 = vpack.c.bf16 %v790, %v787
    %v1092 = vpack.c.bf16 %v794, %v791
    %v1093 = vpack.c.bf16 %v795, %v792
    %v1094 = vpack.c.bf16 %v796, %v793
    %v1095 = vpack.c.bf16 %v800, %v797
    %v1096 = vpack.c.bf16 %v801, %v798
    %v1097 = vpack.c.bf16 %v802, %v799
    %v1098 = vpack.c.bf16 %v806, %v803
    %v1099 = vpack.c.bf16 %v807, %v804
    %v1100 = vpack.c.bf16 %v808, %v805
    %v1101 = vpack.c.bf16 %v812, %v809
    %v1102 = vpack.c.bf16 %v813, %v810
    %v1103 = vpack.c.bf16 %v814, %v811
    %v1104 = vpack.c.bf16 %v818, %v815
    %v1105 = vpack.c.bf16 %v819, %v816
    %v1106 = vpack.c.bf16 %v820, %v817
    %v1107 = vpack.c.bf16 %v824, %v821
    %v1108 = vpack.c.bf16 %v825, %v822
    %v1109 = vpack.c.bf16 %v826, %v823
    %v1110 = vpack.c.bf16 %v830, %v827
    %v1111 = vpack.c.bf16 %v831, %v828
    %v1112 = vpack.c.bf16 %v832, %v829
    %v1113 = vpack.c.bf16 %v836, %v833
    %v1114 = vpack.c.bf16 %v837, %v834
    %v1115 = vpack.c.bf16 %v838, %v835
    %v1116 = vpack.c.bf16 %v842, %v839
    %v1117 = vpack.c.bf16 %v843, %v840
    %v1118 = vpack.c.bf16 %v844, %v841
    %v1119 = vpack.c.bf16 %v848, %v845
    %v1120 = vpack.c.bf16 %v849, %v846
    %v1121 = vpack.c.bf16 %v850, %v847
    %v1122 = vpack.c.bf16 %v854, %v851
    %v1123 = vpack.c.bf16 %v855, %v852
    %v1124 = vpack.c.bf16 %v856, %v853
    %v1125 = vpack.c.bf16 %v860, %v857
    %v1126 = vpack.c.bf16 %v861, %v858
    %v1127 = vpack.c.bf16 %v862, %v859
    %v1128 = vpack.c.bf16 %v866, %v863
    %v1129 = vpack.c.bf16 %v867, %v864
    %v1130 = vpack.c.bf16 %v868, %v865
    %v1131 = vpack.c.bf16 %v872, %v869
    %v1132 = vpack.c.bf16 %v873, %v870
    %v1133 = vpack.c.bf16 %v874, %v871
    %v1134 = vpack.c.bf16 %v878, %v875
    %v1135 = vpack.c.bf16 %v879, %v876
    %v1136 = vpack.c.bf16 %v880, %v877
    %v1137 = vpack.c.bf16 %v884, %v881
    %v1138 = vpack.c.bf16 %v885, %v882
    %v1139 = vpack.c.bf16 %v886, %v883
    %v1140 = vpack.c.bf16 %v890, %v887
    %v1141 = vpack.c.bf16 %v891, %v888
    %v1142 = vpack.c.bf16 %v892, %v889
    %v1143 = vpack.c.bf16 %v896, %v893
    %v1144 = vpack.c.bf16 %v897, %v894
    %v1145 = vpack.c.bf16 %v898, %v895
    %v1146 = vpack.c.bf16 %v902, %v899
    %v1147 = vpack.c.bf16 %v903, %v900
    %v1148 = vpack.c.bf16 %v904, %v901
    %v1149 = vpack.c.bf16 %v908, %v905
    %v1150 = vpack.c.bf16 %v909, %v906
    %v1151 = vpack.c.bf16 %v910, %v907
    %v1152 = vpack.c.bf16 %v914, %v911
    %v1153 = vpack.c.bf16 %v915, %v912
    %v1154 = vpack.c.bf16 %v916, %v913
    %v1155 = vpack.c.bf16 %v920, %v917
    %v1156 = vpack.c.bf16 %v921, %v918
    %v1157 = vpack.c.bf16 %v922, %v919
    %v1158 = vpack.c.bf16 %v926, %v923
    %v1159 = vpack.c.bf16 %v927, %v924
    %v1160 = vpack.c.bf16 %v928, %v925
    %v1161 = vpack.c.bf16 %v932, %v929
    %v1162 = vpack.c.bf16 %v933, %v930
    %v1163 = vpack.c.bf16 %v934, %v931
    %v1164 = vpack.c.bf16 %v938, %v935
    %v1165 = vpack.c.bf16 %v939, %v936
    %v1166 = vpack.c.bf16 %v940, %v937
    %v1167 = vpack.c.bf16 %v944, %v941
    %v1168 = vpack.c.bf16 %v945, %v942
    %v1169 = vpack.c.bf16 %v946, %v943
    %v1170 = vpack.c.bf16 %v950, %v947
    %v1171 = vpack.c.bf16 %v951, %v948
    %v1172 = vpack.c.bf16 %v952, %v949
    %v1173 = vpack.c.bf16 %v956, %v953
    %v1174 = vpack.c.bf16 %v957, %v954
    %v1175 = vpack.c.bf16 %v958, %v955
    %v1176 = vpack.c.bf16 %v962, %v959
    %v1177 = vpack.c.bf16 %v963, %v960
    %v1178 = vpack.c.bf16 %v964, %v961
    %v1179 = vpack.c.bf16 %v968, %v965
    %v1180 = vpack.c.bf16 %v969, %v966
    %v1181 = vpack.c.bf16 %v970, %v967
    %v1182 = vpack.c.bf16 %v974, %v971
    %v1183 = vpack.c.bf16 %v975, %v972
    %v1184 = vpack.c.bf16 %v976, %v973
    %v1185 = vpack.c.bf16 %v980, %v977
    %v1186 = vpack.c.bf16 %v981, %v978
    %v1187 = vpack.c.bf16 %v982, %v979
    %v1188 = vpack.c.bf16 %v986, %v983
    %v1189 = vpack.c.bf16 %v987, %v984
    %v1190 = vpack.c.bf16 %v988, %v985
    %v1191 = vpack.c.bf16 %v992, %v989
    %v1192 = vpack.c.bf16 %v993, %v990
    %v1193 = vpack.c.bf16 %v994, %v991
    %v1194 = vpack.c.bf16 %v998, %v995
    %v1195 = vpack.c.bf16 %v999, %v996
    %v1196 = vpack.c.bf16 %v1000, %v997
    %v1197 = vpack.c.bf16 %v1004, %v1001
    %v1198 = vpack.c.bf16 %v1005, %v1002
    %v1199 = vpack.c.bf16 %v1006, %v1003
    %v1200 = vpack.c.bf16 %v1010, %v1007
    %v1201 = vpack.c.bf16 %v1011, %v1008
    %v1202 = vpack.c.bf16 %v1012, %v1009
    %v1203 = vpack.c.bf16 %v1016, %v1013
    %v1204 = vpack.c.bf16 %v1017, %v1014
    %v1205 = vpack.c.bf16 %v1018, %v1015
    %v1206 = vpack.c.bf16 %v1022, %v1019
    %v1207 = vpack.c.bf16 %v1023, %v1020
    %v1208 = vpack.c.bf16 %v1024, %v1021
    %v1209 = vpack.c.bf16 %v1028, %v1025
    %v1210 = vpack.c.bf16 %v1029, %v1026
    %v1211 = vpack.c.bf16 %v1030, %v1027
    %v1212 = vpack.c.bf16 %v1034, %v1031
    %v1213 = vpack.c.bf16 %v1035, %v1032
    %v1214 = vpack.c.bf16 %v1036, %v1033
    %v1215 = vpack.c.bf16 %v1040, %v1037
    %v1216 = vpack.c.bf16 %v1041, %v1038
    %v1217 = vpack.c.bf16 %v1042, %v1039
    %v1218 = vld [vmem:[%s2] sm:$0x7]
    %v1220 = vlaneseq
    %v1221 = vshrl.u32 %v1220, 7
    %v1222 = vsub.s32 0, %v1221
    %v1223 = vrot.slane %v1218, %v1222
    %v1224 = vlaneseq
    %v1225 = vshrl.u32 %v1224, 7
    %v1226 = vsub.s32 1, %v1225
    %v1227 = vrot.slane %v1218, %v1226
    %v1228 = vlaneseq
    %v1229 = vshrl.u32 %v1228, 7
    %v1230 = vsub.s32 2, %v1229
    %v1231 = vrot.slane %v1218, %v1230
    %1235 = vmatprep.subr.bf16.mxu0 %v1072
    %1236 = vmatpush1.bf16.msra.mxu0 %v1071
    %1237 = vmatprep.subr.bf16.mxu0 %v1069
    %1238 = vmatpush1.bf16.msra.mxu0 %v1068
    %1239 = vmatprep.subr.bf16.mxu0 %v1066
    %1240 = vmatpush1.bf16.msra.mxu0 %v1065
    %1241 = vmatprep.subr.bf16.mxu0 %v1063
    %1242 = vmatpush1.bf16.msra.mxu0 %v1062
    %1243 = vmatprep.subr.bf16.mxu0 %v1060
    %1244 = vmatpush1.bf16.msra.mxu0 %v1059
    %1245 = vmatprep.subr.bf16.mxu0 %v1057
    %1246 = vmatpush1.bf16.msra.mxu0 %v1056
    %1247 = vmatprep.subr.bf16.mxu0 %v1054
    %1248 = vmatpush1.bf16.msra.mxu0 %v1053
    %1249 = vmatprep.subr.bf16.mxu0 %v1051
    %1250 = vmatpush1.bf16.msra.mxu0 %v1050
    %1251 = vmatprep.subr.bf16.mxu0 %v1096
    %1252 = vmatpush2.bf16.msra.mxu0 %v1095
    %1253 = vmatprep.subr.bf16.mxu0 %v1093
    %1254 = vmatpush2.bf16.msra.mxu0 %v1092
    %1255 = vmatprep.subr.bf16.mxu0 %v1090
    %1256 = vmatpush2.bf16.msra.mxu0 %v1089
    %1257 = vmatprep.subr.bf16.mxu0 %v1087
    %1258 = vmatpush2.bf16.msra.mxu0 %v1086
    %1259 = vmatprep.subr.bf16.mxu0 %v1084
    %1260 = vmatpush2.bf16.msra.mxu0 %v1083
    %1261 = vmatprep.subr.bf16.mxu0 %v1081
    %1262 = vmatpush2.bf16.msra.mxu0 %v1080
    %1263 = vmatprep.subr.bf16.mxu0 %v1078
    %1264 = vmatpush2.bf16.msra.mxu0 %v1077
    %1265 = vmatprep.subr.bf16.mxu0 %v1075
    %1266 = vmatpush2.bf16.msra.mxu0 %v1074
    %1267 = vmatprep.mubr.bf16.mxu0 %v1044
    %1268 = vmatmul.mubr.bf16.gmra.mxu0 %v1043
    %v1269 = vpop.f32.mrf.mxu0
    %v1270 = vadd.f32 %v1223, %v1269
    %v1271 = vpop.f32.mrf.mxu0
    %v1272 = vadd.f32 %v1227, %v1271
    %v1273 = vpop.f32.mrf.mxu0
    %v1274 = vpop.f32.mrf.mxu0
    %1275 = vdwg.mxu0
    %1276 = vmatprep.subr.bf16.mxu0 %v1120
    %1277 = vmatpush1.bf16.msra.mxu0 %v1119
    %1278 = vmatprep.subr.bf16.mxu0 %v1117
    %1279 = vmatpush1.bf16.msra.mxu0 %v1116
    %1280 = vmatprep.subr.bf16.mxu0 %v1114
    %1281 = vmatpush1.bf16.msra.mxu0 %v1113
    %1282 = vmatprep.subr.bf16.mxu0 %v1111
    %1283 = vmatpush1.bf16.msra.mxu0 %v1110
    %1284 = vmatprep.subr.bf16.mxu0 %v1108
    %1285 = vmatpush1.bf16.msra.mxu0 %v1107
    %1286 = vmatprep.subr.bf16.mxu0 %v1105
    %1287 = vmatpush1.bf16.msra.mxu0 %v1104
    %1288 = vmatprep.subr.bf16.mxu0 %v1102
    %1289 = vmatpush1.bf16.msra.mxu0 %v1101
    %1290 = vmatprep.subr.bf16.mxu0 %v1099
    %1291 = vmatpush1.bf16.msra.mxu0 %v1098
    %1292 = vmatprep.subr.bf16.mxu0 %v1144
    %1293 = vmatpush2.bf16.msra.mxu0 %v1143
    %1294 = vmatprep.subr.bf16.mxu0 %v1141
    %1295 = vmatpush2.bf16.msra.mxu0 %v1140
    %1296 = vmatprep.subr.bf16.mxu0 %v1138
    %1297 = vmatpush2.bf16.msra.mxu0 %v1137
    %1298 = vmatprep.subr.bf16.mxu0 %v1135
    %1299 = vmatpush2.bf16.msra.mxu0 %v1134
    %1300 = vmatprep.subr.bf16.mxu0 %v1132
    %1301 = vmatpush2.bf16.msra.mxu0 %v1131
    %1302 = vmatprep.subr.bf16.mxu0 %v1129
    %1303 = vmatpush2.bf16.msra.mxu0 %v1128
    %1304 = vmatprep.subr.bf16.mxu0 %v1126
    %1305 = vmatpush2.bf16.msra.mxu0 %v1125
    %1306 = vmatprep.subr.bf16.mxu0 %v1123
    %1307 = vmatpush2.bf16.msra.mxu0 %v1122
    %1308 = vmatprep.mubr.bf16.mxu0 %v1046
    %1309 = vmatmul.mubr.bf16.gmra.mxu0 %v1045
    %v1310 = vpop.f32.mrf.mxu0
    %v1311 = vadd.f32 %v1270, %v1310
    %v1312 = vpop.f32.mrf.mxu0
    %v1313 = vadd.f32 %v1272, %v1312
    %v1314 = vpop.f32.mrf.mxu0
    %v1315 = vpop.f32.mrf.mxu0
    %1316 = vdwg.mxu0
    %1317 = vmatprep.subr.bf16.mxu0 %v1168
    %1318 = vmatpush1.bf16.msra.mxu0 %v1167
    %1319 = vmatprep.subr.bf16.mxu0 %v1165
    %1320 = vmatpush1.bf16.msra.mxu0 %v1164
    %1321 = vmatprep.subr.bf16.mxu0 %v1162
    %1322 = vmatpush1.bf16.msra.mxu0 %v1161
    %1323 = vmatprep.subr.bf16.mxu0 %v1159
    %1324 = vmatpush1.bf16.msra.mxu0 %v1158
    %1325 = vmatprep.subr.bf16.mxu0 %v1156
    %1326 = vmatpush1.bf16.msra.mxu0 %v1155
    %1327 = vmatprep.subr.bf16.mxu0 %v1153
    %1328 = vmatpush1.bf16.msra.mxu0 %v1152
    %1329 = vmatprep.subr.bf16.mxu0 %v1150
    %1330 = vmatpush1.bf16.msra.mxu0 %v1149
    %1331 = vmatprep.subr.bf16.mxu0 %v1147
    %1332 = vmatpush1.bf16.msra.mxu0 %v1146
    %1333 = vmatprep.subr.bf16.mxu0 %v1192
    %1334 = vmatpush2.bf16.msra.mxu0 %v1191
    %1335 = vmatprep.subr.bf16.mxu0 %v1189
    %1336 = vmatpush2.bf16.msra.mxu0 %v1188
    %1337 = vmatprep.subr.bf16.mxu0 %v1186
    %1338 = vmatpush2.bf16.msra.mxu0 %v1185
    %1339 = vmatprep.subr.bf16.mxu0 %v1183
    %1340 = vmatpush2.bf16.msra.mxu0 %v1182
    %1341 = vmatprep.subr.bf16.mxu0 %v1180
    %1342 = vmatpush2.bf16.msra.mxu0 %v1179
    %1343 = vmatprep.subr.bf16.mxu0 %v1177
    %1344 = vmatpush2.bf16.msra.mxu0 %v1176
    %1345 = vmatprep.subr.bf16.mxu0 %v1174
    %1346 = vmatpush2.bf16.msra.mxu0 %v1173
    %1347 = vmatprep.subr.bf16.mxu0 %v1171
    %1348 = vmatpush2.bf16.msra.mxu0 %v1170
    %1349 = vmatprep.mubr.bf16.mxu0 %v1048
    %1350 = vmatmul.mubr.bf16.gmra.mxu0 %v1047
    %v1351 = vpop.f32.mrf.mxu0
    %v1352 = vadd.f32 %v1311, %v1351
    %v1353 = vpop.f32.mrf.mxu0
    %v1354 = vadd.f32 %v1313, %v1353
    %v1355 = vpop.f32.mrf.mxu0
    %v1356 = vpop.f32.mrf.mxu0
    %1357 = vdwg.mxu0
    %1358 = vmatprep.subr.bf16.mxu0 %v1216
    %1359 = vmatpush1.bf16.msra.mxu0 %v1215
    %1360 = vmatprep.subr.bf16.mxu0 %v1213
    %1361 = vmatpush1.bf16.msra.mxu0 %v1212
    %1362 = vmatprep.subr.bf16.mxu0 %v1210
    %1363 = vmatpush1.bf16.msra.mxu0 %v1209
    %1364 = vmatprep.subr.bf16.mxu0 %v1207
    %1365 = vmatpush1.bf16.msra.mxu0 %v1206
    %1366 = vmatprep.subr.bf16.mxu0 %v1204
    %1367 = vmatpush1.bf16.msra.mxu0 %v1203
    %1368 = vmatprep.subr.bf16.mxu0 %v1201
    %1369 = vmatpush1.bf16.msra.mxu0 %v1200
    %1370 = vmatprep.subr.bf16.mxu0 %v1198
    %1371 = vmatpush1.bf16.msra.mxu0 %v1197
    %1372 = vmatprep.subr.bf16.mxu0 %v1195
    %1373 = vmatpush1.bf16.msra.mxu0 %v1194
    %1374 = vmatprep.subr.bf16.mxu0 0
    %1375 = vmatpush2.bf16.msra.mxu0 0
    %1376 = vmatprep.subr.bf16.mxu0 0
    %1377 = vmatpush2.bf16.msra.mxu0 0
    %1378 = vmatprep.subr.bf16.mxu0 0
    %1379 = vmatpush2.bf16.msra.mxu0 0
    %1380 = vmatprep.subr.bf16.mxu0 0
    %1381 = vmatpush2.bf16.msra.mxu0 0
    %1382 = vmatprep.subr.bf16.mxu0 0
    %1383 = vmatpush2.bf16.msra.mxu0 0
    %1384 = vmatprep.subr.bf16.mxu0 0
    %1385 = vmatpush2.bf16.msra.mxu0 0
    %1386 = vmatprep.subr.bf16.mxu0 0
    %1387 = vmatpush2.bf16.msra.mxu0 0
    %1388 = vmatprep.subr.bf16.mxu0 0
    %1389 = vmatpush2.bf16.msra.mxu0 0
    %1390 = vmatprep.mubr.bf16.mxu0 0
    %1391 = vmatmul.mubr.bf16.gmra.mxu0 %v1049
    %v1392 = vpop.f32.mrf.mxu0
    %v1393 = vadd.f32 %v1352, %v1392
    %v1394 = vpop.f32.mrf.mxu0
    %v1395 = vadd.f32 %v1354, %v1394
    %v1396 = vpop.f32.mrf.mxu0
    %v1397 = vpop.f32.mrf.mxu0
    %1398 = vdwg.mxu0
    %1399 = vmatprep.subr.bf16.mxu0 0
    %1400 = vmatpush1.bf16.msra.mxu0 %v1073
    %1401 = vmatprep.subr.bf16.mxu0 0
    %1402 = vmatpush1.bf16.msra.mxu0 %v1070
    %1403 = vmatprep.subr.bf16.mxu0 0
    %1404 = vmatpush1.bf16.msra.mxu0 %v1067
    %1405 = vmatprep.subr.bf16.mxu0 0
    %1406 = vmatpush1.bf16.msra.mxu0 %v1064
    %1407 = vmatprep.subr.bf16.mxu0 0
    %1408 = vmatpush1.bf16.msra.mxu0 %v1061
    %1409 = vmatprep.subr.bf16.mxu0 0
    %1410 = vmatpush1.bf16.msra.mxu0 %v1058
    %1411 = vmatprep.subr.bf16.mxu0 0
    %1412 = vmatpush1.bf16.msra.mxu0 %v1055
    %1413 = vmatprep.subr.bf16.mxu0 0
    %1414 = vmatpush1.bf16.msra.mxu0 %v1052
    %1415 = vmatprep.subr.bf16.mxu0 0
    %1416 = vmatpush2.bf16.msra.mxu0 %v1097
    %1417 = vmatprep.subr.bf16.mxu0 0
    %1418 = vmatpush2.bf16.msra.mxu0 %v1094
    %1419 = vmatprep.subr.bf16.mxu0 0
    %1420 = vmatpush2.bf16.msra.mxu0 %v1091
    %1421 = vmatprep.subr.bf16.mxu0 0
    %1422 = vmatpush2.bf16.msra.mxu0 %v1088
    %1423 = vmatprep.subr.bf16.mxu0 0
    %1424 = vmatpush2.bf16.msra.mxu0 %v1085
    %1425 = vmatprep.subr.bf16.mxu0 0
    %1426 = vmatpush2.bf16.msra.mxu0 %v1082
    %1427 = vmatprep.subr.bf16.mxu0 0
    %1428 = vmatpush2.bf16.msra.mxu0 %v1079
    %1429 = vmatprep.subr.bf16.mxu0 0
    %1430 = vmatpush2.bf16.msra.mxu0 %v1076
    %1431 = vmatprep.mubr.bf16.mxu0 %v1044
    %1432 = vmatmul.mubr.bf16.gmra.mxu0 %v1043
    %v1433 = vpop.f32.mrf.mxu0
    %v1434 = vadd.f32 %v1231, %v1433
    %v1435 = vpop.f32.mrf.mxu0
    %v1436 = vpop.f32.mrf.mxu0
    %v1437 = vpop.f32.mrf.mxu0
    %1438 = vdwg.mxu0
    %1439 = vmatprep.subr.bf16.mxu0 0
    %1440 = vmatpush1.bf16.msra.mxu0 %v1121
    %1441 = vmatprep.subr.bf16.mxu0 0
    %1442 = vmatpush1.bf16.msra.mxu0 %v1118
    %1443 = vmatprep.subr.bf16.mxu0 0
    %1444 = vmatpush1.bf16.msra.mxu0 %v1115
    %1445 = vmatprep.subr.bf16.mxu0 0
    %1446 = vmatpush1.bf16.msra.mxu0 %v1112
    %1447 = vmatprep.subr.bf16.mxu0 0
    %1448 = vmatpush1.bf16.msra.mxu0 %v1109
    %1449 = vmatprep.subr.bf16.mxu0 0
    %1450 = vmatpush1.bf16.msra.mxu0 %v1106
    %1451 = vmatprep.subr.bf16.mxu0 0
    %1452 = vmatpush1.bf16.msra.mxu0 %v1103
    %1453 = vmatprep.subr.bf16.mxu0 0
    %1454 = vmatpush1.bf16.msra.mxu0 %v1100
    %1455 = vmatprep.subr.bf16.mxu0 0
    %1456 = vmatpush2.bf16.msra.mxu0 %v1145
    %1457 = vmatprep.subr.bf16.mxu0 0
    %1458 = vmatpush2.bf16.msra.mxu0 %v1142
    %1459 = vmatprep.subr.bf16.mxu0 0
    %1460 = vmatpush2.bf16.msra.mxu0 %v1139
    %1461 = vmatprep.subr.bf16.mxu0 0
    %1462 = vmatpush2.bf16.msra.mxu0 %v1136
    %1463 = vmatprep.subr.bf16.mxu0 0
    %1464 = vmatpush2.bf16.msra.mxu0 %v1133
    %1465 = vmatprep.subr.bf16.mxu0 0
    %1466 = vmatpush2.bf16.msra.mxu0 %v1130
    %1467 = vmatprep.subr.bf16.mxu0 0
    %1468 = vmatpush2.bf16.msra.mxu0 %v1127
    %1469 = vmatprep.subr.bf16.mxu0 0
    %1470 = vmatpush2.bf16.msra.mxu0 %v1124
    %1471 = vmatprep.mubr.bf16.mxu0 %v1046
    %1472 = vmatmul.mubr.bf16.gmra.mxu0 %v1045
    %v1473 = vpop.f32.mrf.mxu0
    %v1474 = vadd.f32 %v1434, %v1473
    %v1475 = vpop.f32.mrf.mxu0
    %v1476 = vpop.f32.mrf.mxu0
    %v1477 = vpop.f32.mrf.mxu0
    %1478 = vdwg.mxu0
    %1479 = vmatprep.subr.bf16.mxu0 0
    %1480 = vmatpush1.bf16.msra.mxu0 %v1169
    %1481 = vmatprep.subr.bf16.mxu0 0
    %1482 = vmatpush1.bf16.msra.mxu0 %v1166
    %1483 = vmatprep.subr.bf16.mxu0 0
    %1484 = vmatpush1.bf16.msra.mxu0 %v1163
    %1485 = vmatprep.subr.bf16.mxu0 0
    %1486 = vmatpush1.bf16.msra.mxu0 %v1160
    %1487 = vmatprep.subr.bf16.mxu0 0
    %1488 = vmatpush1.bf16.msra.mxu0 %v1157
    %1489 = vmatprep.subr.bf16.mxu0 0
    %1490 = vmatpush1.bf16.msra.mxu0 %v1154
    %1491 = vmatprep.subr.bf16.mxu0 0
    %1492 = vmatpush1.bf16.msra.mxu0 %v1151
    %1493 = vmatprep.subr.bf16.mxu0 0
    %1494 = vmatpush1.bf16.msra.mxu0 %v1148
    %1495 = vmatprep.subr.bf16.mxu0 0
    %1496 = vmatpush2.bf16.msra.mxu0 %v1193
    %1497 = vmatprep.subr.bf16.mxu0 0
    %1498 = vmatpush2.bf16.msra.mxu0 %v1190
    %1499 = vmatprep.subr.bf16.mxu0 0
    %1500 = vmatpush2.bf16.msra.mxu0 %v1187
    %1501 = vmatprep.subr.bf16.mxu0 0
    %1502 = vmatpush2.bf16.msra.mxu0 %v1184
    %1503 = vmatprep.subr.bf16.mxu0 0
    %1504 = vmatpush2.bf16.msra.mxu0 %v1181
    %1505 = vmatprep.subr.bf16.mxu0 0
    %1506 = vmatpush2.bf16.msra.mxu0 %v1178
    %1507 = vmatprep.subr.bf16.mxu0 0
    %1508 = vmatpush2.bf16.msra.mxu0 %v1175
    %1509 = vmatprep.subr.bf16.mxu0 0
    %1510 = vmatpush2.bf16.msra.mxu0 %v1172
    %1511 = vmatprep.mubr.bf16.mxu0 %v1048
    %1512 = vmatmul.mubr.bf16.gmra.mxu0 %v1047
    %v1513 = vpop.f32.mrf.mxu0
    %v1514 = vadd.f32 %v1474, %v1513
    %v1515 = vpop.f32.mrf.mxu0
    %v1516 = vpop.f32.mrf.mxu0
    %v1517 = vpop.f32.mrf.mxu0
    %1518 = vdwg.mxu0
    %1519 = vmatprep.subr.bf16.mxu0 0
    %1520 = vmatpush1.bf16.msra.mxu0 %v1217
    %1521 = vmatprep.subr.bf16.mxu0 0
    %1522 = vmatpush1.bf16.msra.mxu0 %v1214
    %1523 = vmatprep.subr.bf16.mxu0 0
    %1524 = vmatpush1.bf16.msra.mxu0 %v1211
    %1525 = vmatprep.subr.bf16.mxu0 0
    %1526 = vmatpush1.bf16.msra.mxu0 %v1208
    %1527 = vmatprep.subr.bf16.mxu0 0
    %1528 = vmatpush1.bf16.msra.mxu0 %v1205
    %1529 = vmatprep.subr.bf16.mxu0 0
    %1530 = vmatpush1.bf16.msra.mxu0 %v1202
    %1531 = vmatprep.subr.bf16.mxu0 0
    %1532 = vmatpush1.bf16.msra.mxu0 %v1199
    %1533 = vmatprep.subr.bf16.mxu0 0
    %1534 = vmatpush1.bf16.msra.mxu0 %v1196
    %1535 = vmatprep.subr.bf16.mxu0 0
    %1536 = vmatpush2.bf16.msra.mxu0 0
    %1537 = vmatprep.subr.bf16.mxu0 0
    %1538 = vmatpush2.bf16.msra.mxu0 0
    %1539 = vmatprep.subr.bf16.mxu0 0
    %1540 = vmatpush2.bf16.msra.mxu0 0
    %1541 = vmatprep.subr.bf16.mxu0 0
    %1542 = vmatpush2.bf16.msra.mxu0 0
    %1543 = vmatprep.subr.bf16.mxu0 0
    %1544 = vmatpush2.bf16.msra.mxu0 0
    %1545 = vmatprep.subr.bf16.mxu0 0
    %1546 = vmatpush2.bf16.msra.mxu0 0
    %1547 = vmatprep.subr.bf16.mxu0 0
    %1548 = vmatpush2.bf16.msra.mxu0 0
    %1549 = vmatprep.subr.bf16.mxu0 0
    %1550 = vmatpush2.bf16.msra.mxu0 0
    %1551 = vmatprep.mubr.bf16.mxu0 0
    %1552 = vmatmul.mubr.bf16.gmra.mxu0 %v1049
    %v1553 = vpop.f32.mrf.mxu0
    %v1554 = vadd.f32 %v1514, %v1553
    %v1555 = vpop.f32.mrf.mxu0
    %v1556 = vpop.f32.mrf.mxu0
    %v1557 = vpop.f32.mrf.mxu0
    %1558 = vdwg.mxu0
    %v1559 = vmax.f32 %v1393, 0.0
    %v1560 = vmax.f32 %v1395, 0.0
    %v1561 = vmax.f32 %v1554, 0.0
    %v1562 = vld [vmem:[%s3] sm:$0xff]
    %v1563 = vld [vmem:[%s3 + $0x8] sm:$0xff]
    %v1564 = vld [vmem:[%s3 + $0x10] sm:$0xff]
    %v1565 = vld [vmem:[%s3 + $0x18] sm:$0xff]
    %v1566 = vld [vmem:[%s3 + $0x20] sm:$0xff]
    %v1567 = vld [vmem:[%s3 + $0x28] sm:$0xff]
    %v1568 = vld [vmem:[%s3 + $0x30] sm:$0xff]
    %v1569 = vld [vmem:[%s3 + $0x38] sm:$0xff]
    %v1570 = vld [vmem:[%s3 + $0x40] sm:$0xff]
    %v1571 = vld [vmem:[%s3 + $0x48] sm:$0xff]
    %v1572 = vld [vmem:[%s3 + $0x50] sm:$0xff]
    %v1573 = vld [vmem:[%s3 + $0x58] sm:$0xff]
    %v1574 = vld [vmem:[%s3 + $0x60] sm:$0xff]
    %v1575 = vld [vmem:[%s3 + $0x68] sm:$0xff]
    %v1576 = vld [vmem:[%s3 + $0x70] sm:$0xff]
    %v1577 = vld [vmem:[%s3 + $0x78] sm:$0xff]
    %v1578 = vld [vmem:[%s3 + $0x80] sm:$0xff]
    %v1579 = vld [vmem:[%s3 + $0x88] sm:$0xff]
    %v1580 = vld [vmem:[%s3 + $0x90] sm:$0xff]
    %v1581 = vld [vmem:[%s3 + $0x98] sm:$0xff]
    %v1582 = vld [vmem:[%s3 + $0xa0] sm:$0xff]
    %v1583 = vld [vmem:[%s3 + $0xa8] sm:$0xff]
    %v1584 = vld [vmem:[%s3 + $0xb0] sm:$0xff]
    %v1585 = vld [vmem:[%s3 + $0xb8] sm:$0xff]
    %v1586 = vld [vmem:[%s3 + $0xc0] sm:$0xff]
    %v1587 = vld [vmem:[%s3 + $0xc8] sm:$0xff]
    %v1588 = vld [vmem:[%s3 + $0xd0] sm:$0xff]
    %v1589 = vld [vmem:[%s3 + $0xd8] sm:$0xff]
    %v1590 = vld [vmem:[%s3 + $0xe0] sm:$0xff]
    %v1591 = vld [vmem:[%s3 + $0xe8] sm:$0xff]
    %v1592 = vld [vmem:[%s3 + $0xf0] sm:$0xff]
    %v1593 = vld [vmem:[%s3 + $0xf8] sm:$0xff]
    %v1594 = vld [vmem:[%s3 + $0x100] sm:$0xff]
    %v1595 = vld [vmem:[%s3 + $0x108] sm:$0xff]
    %v1596 = vld [vmem:[%s3 + $0x110] sm:$0xff]
    %v1597 = vld [vmem:[%s3 + $0x118] sm:$0xff]
    %v1598 = vld [vmem:[%s3 + $0x120] sm:$0xff]
    %v1599 = vld [vmem:[%s3 + $0x128] sm:$0xff]
    %v1600 = vld [vmem:[%s3 + $0x130] sm:$0xff]
    %v1601 = vld [vmem:[%s3 + $0x138] sm:$0xff]
    %v1602 = vld [vmem:[%s3 + $0x140] sm:$0xff]
    %v1603 = vld [vmem:[%s3 + $0x148] sm:$0xff]
    %v1604 = vld [vmem:[%s3 + $0x150] sm:$0xff]
    %v1605 = vld [vmem:[%s3 + $0x158] sm:$0xff]
    %v1606 = vld [vmem:[%s3 + $0x160] sm:$0xff]
    %v1607 = vld [vmem:[%s3 + $0x168] sm:$0xff]
    %v1608 = vld [vmem:[%s3 + $0x170] sm:$0xff]
    %v1609 = vld [vmem:[%s3 + $0x178] sm:$0xff]
    %v1610 = vand.u32 2147483647, %v1562
    %v1611 = vand.u32 2147483647, %v1563
    %v1612 = vand.u32 2147483647, %v1564
    %v1613 = vand.u32 2147483647, %v1565
    %v1614 = vand.u32 2147483647, %v1566
    %v1615 = vand.u32 2147483647, %v1567
    %v1616 = vand.u32 2147483647, %v1568
    %v1617 = vand.u32 2147483647, %v1569
    %v1618 = vand.u32 2147483647, %v1570
    %v1619 = vand.u32 2147483647, %v1571
    %v1620 = vand.u32 2147483647, %v1572
    %v1621 = vand.u32 2147483647, %v1573
    %v1622 = vand.u32 2147483647, %v1574
    %v1623 = vand.u32 2147483647, %v1575
    %v1624 = vand.u32 2147483647, %v1576
    %v1625 = vand.u32 2147483647, %v1577
    %v1626 = vand.u32 2147483647, %v1578
    %v1627 = vand.u32 2147483647, %v1579
    %v1628 = vand.u32 2147483647, %v1580
    %v1629 = vand.u32 2147483647, %v1581
    %v1630 = vand.u32 2147483647, %v1582
    %v1631 = vand.u32 2147483647, %v1583
    %v1632 = vand.u32 2147483647, %v1584
    %v1633 = vand.u32 2147483647, %v1585
    %v1634 = vand.u32 2147483647, %v1586
    %v1635 = vand.u32 2147483647, %v1587
    %v1636 = vand.u32 2147483647, %v1588
    %v1637 = vand.u32 2147483647, %v1589
    %v1638 = vand.u32 2147483647, %v1590
    %v1639 = vand.u32 2147483647, %v1591
    %v1640 = vand.u32 2147483647, %v1592
    %v1641 = vand.u32 2147483647, %v1593
    %v1642 = vand.u32 2147483647, %v1594
    %v1643 = vand.u32 2147483647, %v1595
    %v1644 = vand.u32 2147483647, %v1596
    %v1645 = vand.u32 2147483647, %v1597
    %v1646 = vand.u32 2147483647, %v1598
    %v1647 = vand.u32 2147483647, %v1599
    %v1648 = vand.u32 2147483647, %v1600
    %v1649 = vand.u32 2147483647, %v1601
    %v1650 = vand.u32 2147483647, %v1602
    %v1651 = vand.u32 2147483647, %v1603
    %v1652 = vand.u32 2147483647, %v1604
    %v1653 = vand.u32 2147483647, %v1605
    %v1654 = vand.u32 2147483647, %v1606
    %v1655 = vand.u32 2147483647, %v1607
    %v1656 = vand.u32 2147483647, %v1608
    %v1657 = vand.u32 2147483647, %v1609
    %v1658 = vmul.f32 %v1562, %v1610
    %v1659 = vmul.f32 %v1563, %v1611
    %v1660 = vmul.f32 %v1564, %v1612
    %v1661 = vmul.f32 %v1565, %v1613
    %v1662 = vmul.f32 %v1566, %v1614
    %v1663 = vmul.f32 %v1567, %v1615
    %v1664 = vmul.f32 %v1568, %v1616
    %v1665 = vmul.f32 %v1569, %v1617
    %v1666 = vmul.f32 %v1570, %v1618
    %v1667 = vmul.f32 %v1571, %v1619
    %v1668 = vmul.f32 %v1572, %v1620
    %v1669 = vmul.f32 %v1573, %v1621
    %v1670 = vmul.f32 %v1574, %v1622
    %v1671 = vmul.f32 %v1575, %v1623
    %v1672 = vmul.f32 %v1576, %v1624
    %v1673 = vmul.f32 %v1577, %v1625
    %v1674 = vmul.f32 %v1578, %v1626
    %v1675 = vmul.f32 %v1579, %v1627
    %v1676 = vmul.f32 %v1580, %v1628
    %v1677 = vmul.f32 %v1581, %v1629
    %v1678 = vmul.f32 %v1582, %v1630
    %v1679 = vmul.f32 %v1583, %v1631
    %v1680 = vmul.f32 %v1584, %v1632
    %v1681 = vmul.f32 %v1585, %v1633
    %v1682 = vmul.f32 %v1586, %v1634
    %v1683 = vmul.f32 %v1587, %v1635
    %v1684 = vmul.f32 %v1588, %v1636
    %v1685 = vmul.f32 %v1589, %v1637
    %v1686 = vmul.f32 %v1590, %v1638
    %v1687 = vmul.f32 %v1591, %v1639
    %v1688 = vmul.f32 %v1592, %v1640
    %v1689 = vmul.f32 %v1593, %v1641
    %v1690 = vmul.f32 %v1594, %v1642
    %v1691 = vmul.f32 %v1595, %v1643
    %v1692 = vmul.f32 %v1596, %v1644
    %v1693 = vmul.f32 %v1597, %v1645
    %v1694 = vmul.f32 %v1598, %v1646
    %v1695 = vmul.f32 %v1599, %v1647
    %v1696 = vmul.f32 %v1600, %v1648
    %v1697 = vmul.f32 %v1601, %v1649
    %v1698 = vmul.f32 %v1602, %v1650
    %v1699 = vmul.f32 %v1603, %v1651
    %v1700 = vmul.f32 %v1604, %v1652
    %v1701 = vmul.f32 %v1605, %v1653
    %v1702 = vmul.f32 %v1606, %v1654
    %v1703 = vmul.f32 %v1607, %v1655
    %v1704 = vmul.f32 %v1608, %v1656
    %v1705 = vmul.f32 %v1609, %v1657
    %v1706 = vpack.c.bf16 %v1559, %v1559
    %v1707 = vpack.c.bf16 %v1560, %v1560
    %v1708 = vpack.c.bf16 %v1561, %v1561
    %v1709 = vpack.c.bf16 %v1659, %v1658
    %v1710 = vpack.c.bf16 %v1661, %v1660
    %v1711 = vpack.c.bf16 %v1663, %v1662
    %v1712 = vpack.c.bf16 %v1665, %v1664
    %v1713 = vpack.c.bf16 %v1667, %v1666
    %v1714 = vpack.c.bf16 %v1669, %v1668
    %v1715 = vpack.c.bf16 %v1671, %v1670
    %v1716 = vpack.c.bf16 %v1673, %v1672
    %v1717 = vpack.c.bf16 %v1675, %v1674
    %v1718 = vpack.c.bf16 %v1677, %v1676
    %v1719 = vpack.c.bf16 %v1679, %v1678
    %v1720 = vpack.c.bf16 %v1681, %v1680
    %v1721 = vpack.c.bf16 %v1683, %v1682
    %v1722 = vpack.c.bf16 %v1685, %v1684
    %v1723 = vpack.c.bf16 %v1687, %v1686
    %v1724 = vpack.c.bf16 %v1689, %v1688
    %v1725 = vpack.c.bf16 %v1691, %v1690
    %v1726 = vpack.c.bf16 %v1693, %v1692
    %v1727 = vpack.c.bf16 %v1695, %v1694
    %v1728 = vpack.c.bf16 %v1697, %v1696
    %v1729 = vpack.c.bf16 %v1699, %v1698
    %v1730 = vpack.c.bf16 %v1701, %v1700
    %v1731 = vpack.c.bf16 %v1703, %v1702
    %v1732 = vpack.c.bf16 %v1705, %v1704
    %v1733 = vld [vmem:[%s4] sm:$0x1]
    %v1735 = vlaneseq
    %v1736 = vshrl.u32 %v1735, 7
    %v1737 = vsub.s32 0, %v1736
    %v1738 = vrot.slane %v1733, %v1737
    %1740 = vmatprep.subr.bf16.mxu0 0
    %1741 = vmatpush1.bf16.msra.mxu0 %v1716
    %1742 = vmatprep.subr.bf16.mxu0 0
    %1743 = vmatpush1.bf16.msra.mxu0 %v1715
    %1744 = vmatprep.subr.bf16.mxu0 0
    %1745 = vmatpush1.bf16.msra.mxu0 %v1714
    %1746 = vmatprep.subr.bf16.mxu0 0
    %1747 = vmatpush1.bf16.msra.mxu0 %v1713
    %1748 = vmatprep.subr.bf16.mxu0 0
    %1749 = vmatpush1.bf16.msra.mxu0 %v1712
    %1750 = vmatprep.subr.bf16.mxu0 0
    %1751 = vmatpush1.bf16.msra.mxu0 %v1711
    %1752 = vmatprep.subr.bf16.mxu0 0
    %1753 = vmatpush1.bf16.msra.mxu0 %v1710
    %1754 = vmatprep.subr.bf16.mxu0 0
    %1755 = vmatpush1.bf16.msra.mxu0 %v1709
    %1756 = vmatprep.subr.bf16.mxu0 0
    %1757 = vmatpush2.bf16.msra.mxu0 %v1724
    %1758 = vmatprep.subr.bf16.mxu0 0
    %1759 = vmatpush2.bf16.msra.mxu0 %v1723
    %1760 = vmatprep.subr.bf16.mxu0 0
    %1761 = vmatpush2.bf16.msra.mxu0 %v1722
    %1762 = vmatprep.subr.bf16.mxu0 0
    %1763 = vmatpush2.bf16.msra.mxu0 %v1721
    %1764 = vmatprep.subr.bf16.mxu0 0
    %1765 = vmatpush2.bf16.msra.mxu0 %v1720
    %1766 = vmatprep.subr.bf16.mxu0 0
    %1767 = vmatpush2.bf16.msra.mxu0 %v1719
    %1768 = vmatprep.subr.bf16.mxu0 0
    %1769 = vmatpush2.bf16.msra.mxu0 %v1718
    %1770 = vmatprep.subr.bf16.mxu0 0
    %1771 = vmatpush2.bf16.msra.mxu0 %v1717
    %1772 = vmatprep.mubr.bf16.mxu0 %v1707
    %1773 = vmatmul.mubr.bf16.gmra.mxu0 %v1706
    %v1774 = vpop.f32.mrf.mxu0
    %v1775 = vadd.f32 %v1738, %v1774
    %v1776 = vpop.f32.mrf.mxu0
    %v1777 = vpop.f32.mrf.mxu0
    %v1778 = vpop.f32.mrf.mxu0
    %1779 = vdwg.mxu0
    %1780 = vmatprep.subr.bf16.mxu0 0
    %1781 = vmatpush1.bf16.msra.mxu0 %v1732
    %1782 = vmatprep.subr.bf16.mxu0 0
    %1783 = vmatpush1.bf16.msra.mxu0 %v1731
    %1784 = vmatprep.subr.bf16.mxu0 0
    %1785 = vmatpush1.bf16.msra.mxu0 %v1730
    %1786 = vmatprep.subr.bf16.mxu0 0
    %1787 = vmatpush1.bf16.msra.mxu0 %v1729
    %1788 = vmatprep.subr.bf16.mxu0 0
    %1789 = vmatpush1.bf16.msra.mxu0 %v1728
    %1790 = vmatprep.subr.bf16.mxu0 0
    %1791 = vmatpush1.bf16.msra.mxu0 %v1727
    %1792 = vmatprep.subr.bf16.mxu0 0
    %1793 = vmatpush1.bf16.msra.mxu0 %v1726
    %1794 = vmatprep.subr.bf16.mxu0 0
    %1795 = vmatpush1.bf16.msra.mxu0 %v1725
    %1796 = vmatprep.subr.bf16.mxu0 0
    %1797 = vmatpush2.bf16.msra.mxu0 0
    %1798 = vmatprep.subr.bf16.mxu0 0
    %1799 = vmatpush2.bf16.msra.mxu0 0
    %1800 = vmatprep.subr.bf16.mxu0 0
    %1801 = vmatpush2.bf16.msra.mxu0 0
    %1802 = vmatprep.subr.bf16.mxu0 0
    %1803 = vmatpush2.bf16.msra.mxu0 0
    %1804 = vmatprep.subr.bf16.mxu0 0
    %1805 = vmatpush2.bf16.msra.mxu0 0
    %1806 = vmatprep.subr.bf16.mxu0 0
    %1807 = vmatpush2.bf16.msra.mxu0 0
    %1808 = vmatprep.subr.bf16.mxu0 0
    %1809 = vmatpush2.bf16.msra.mxu0 0
    %1810 = vmatprep.subr.bf16.mxu0 0
    %1811 = vmatpush2.bf16.msra.mxu0 0
    %1812 = vmatprep.mubr.bf16.mxu0 0
    %1813 = vmatmul.mubr.bf16.gmra.mxu0 %v1708
    %v1814 = vpop.f32.mrf.mxu0
    %v1815 = vadd.f32 %v1775, %v1814
    %v1816 = vpop.f32.mrf.mxu0
    %v1817 = vpop.f32.mrf.mxu0
    %v1818 = vpop.f32.mrf.mxu0
    %1819 = vdwg.mxu0
    %v1820 = vmax.f32 %v1815, 0.0
    %v1821 = vld [vmem:[%s5] sm:$0xff]
    %v1822 = vld [vmem:[%s5 + $0x8] sm:$0xff]
    %v1823 = vld [vmem:[%s5 + $0x10] sm:$0xff]
    %v1824 = vld [vmem:[%s5 + $0x18] sm:$0xff]
    %v1825 = vld [vmem:[%s5 + $0x20] sm:$0xff]
    %v1826 = vld [vmem:[%s5 + $0x28] sm:$0xff]
    %v1827 = vld [vmem:[%s5 + $0x30] sm:$0xff]
    %v1828 = vld [vmem:[%s5 + $0x38] sm:$0xff]
    %v1829 = vld [vmem:[%s5 + $0x40] sm:$0xff]
    %v1830 = vld [vmem:[%s5 + $0x48] sm:$0xff]
    %v1831 = vld [vmem:[%s5 + $0x50] sm:$0xff]
    %v1832 = vld [vmem:[%s5 + $0x58] sm:$0xff]
    %v1833 = vld [vmem:[%s5 + $0x60] sm:$0xff]
    %v1834 = vld [vmem:[%s5 + $0x68] sm:$0xff]
    %v1835 = vld [vmem:[%s5 + $0x70] sm:$0xff]
    %v1836 = vld [vmem:[%s5 + $0x78] sm:$0xff]
    %v1837 = vand.u32 2147483647, %v1821
    %v1838 = vand.u32 2147483647, %v1822
    %v1839 = vand.u32 2147483647, %v1823
    %v1840 = vand.u32 2147483647, %v1824
    %v1841 = vand.u32 2147483647, %v1825
    %v1842 = vand.u32 2147483647, %v1826
    %v1843 = vand.u32 2147483647, %v1827
    %v1844 = vand.u32 2147483647, %v1828
    %v1845 = vand.u32 2147483647, %v1829
    %v1846 = vand.u32 2147483647, %v1830
    %v1847 = vand.u32 2147483647, %v1831
    %v1848 = vand.u32 2147483647, %v1832
    %v1849 = vand.u32 2147483647, %v1833
    %v1850 = vand.u32 2147483647, %v1834
    %v1851 = vand.u32 2147483647, %v1835
    %v1852 = vand.u32 2147483647, %v1836
    %v1853 = vmul.f32 %v1821, %v1837
    %v1854 = vmul.f32 %v1822, %v1838
    %v1855 = vmul.f32 %v1823, %v1839
    %v1856 = vmul.f32 %v1824, %v1840
    %v1857 = vmul.f32 %v1825, %v1841
    %v1858 = vmul.f32 %v1826, %v1842
    %v1859 = vmul.f32 %v1827, %v1843
    %v1860 = vmul.f32 %v1828, %v1844
    %v1861 = vmul.f32 %v1829, %v1845
    %v1862 = vmul.f32 %v1830, %v1846
    %v1863 = vmul.f32 %v1831, %v1847
    %v1864 = vmul.f32 %v1832, %v1848
    %v1865 = vmul.f32 %v1833, %v1849
    %v1866 = vmul.f32 %v1834, %v1850
    %v1867 = vmul.f32 %v1835, %v1851
    %v1868 = vmul.f32 %v1836, %v1852
    %v1869 = vpack.c.bf16 %v1820, %v1820
    %v1870 = vpack.c.bf16 %v1854, %v1853
    %v1871 = vpack.c.bf16 %v1856, %v1855
    %v1872 = vpack.c.bf16 %v1858, %v1857
    %v1873 = vpack.c.bf16 %v1860, %v1859
    %v1874 = vpack.c.bf16 %v1862, %v1861
    %v1875 = vpack.c.bf16 %v1864, %v1863
    %v1876 = vpack.c.bf16 %v1866, %v1865
    %v1877 = vpack.c.bf16 %v1868, %v1867
    %v1878 = vld [vmem:[%s6] sm:$0x1]
    %v1880 = vlaneseq
    %v1881 = vshrl.u32 %v1880, 7
    %v1882 = vsub.s32 0, %v1881
    %v1883 = vrot.slane %v1878, %v1882
    %1885 = vmatprep.subr.bf16.mxu0 0
    %1886 = vmatpush1.bf16.msra.mxu0 %v1877
    %1887 = vmatprep.subr.bf16.mxu0 0
    %1888 = vmatpush1.bf16.msra.mxu0 %v1876
    %1889 = vmatprep.subr.bf16.mxu0 0
    %1890 = vmatpush1.bf16.msra.mxu0 %v1875
    %1891 = vmatprep.subr.bf16.mxu0 0
    %1892 = vmatpush1.bf16.msra.mxu0 %v1874
    %1893 = vmatprep.subr.bf16.mxu0 0
    %1894 = vmatpush1.bf16.msra.mxu0 %v1873
    %1895 = vmatprep.subr.bf16.mxu0 0
    %1896 = vmatpush1.bf16.msra.mxu0 %v1872
    %1897 = vmatprep.subr.bf16.mxu0 0
    %1898 = vmatpush1.bf16.msra.mxu0 %v1871
    %1899 = vmatprep.subr.bf16.mxu0 0
    %1900 = vmatpush1.bf16.msra.mxu0 %v1870
    %1901 = vmatprep.subr.bf16.mxu0 0
    %1902 = vmatpush2.bf16.msra.mxu0 0
    %1903 = vmatprep.subr.bf16.mxu0 0
    %1904 = vmatpush2.bf16.msra.mxu0 0
    %1905 = vmatprep.subr.bf16.mxu0 0
    %1906 = vmatpush2.bf16.msra.mxu0 0
    %1907 = vmatprep.subr.bf16.mxu0 0
    %1908 = vmatpush2.bf16.msra.mxu0 0
    %1909 = vmatprep.subr.bf16.mxu0 0
    %1910 = vmatpush2.bf16.msra.mxu0 0
    %1911 = vmatprep.subr.bf16.mxu0 0
    %1912 = vmatpush2.bf16.msra.mxu0 0
    %1913 = vmatprep.subr.bf16.mxu0 0
    %1914 = vmatpush2.bf16.msra.mxu0 0
    %1915 = vmatprep.subr.bf16.mxu0 0
    %1916 = vmatpush2.bf16.msra.mxu0 0
    %1917 = vmatprep.mubr.bf16.mxu0 0
    %1918 = vmatmul.mubr.bf16.gmra.mxu0 %v1869
    %v1919 = vpop.f32.mrf.mxu0
    %v1920 = vadd.f32 %v1883, %v1919
    %v1921 = vpop.f32.mrf.mxu0
    %v1922 = vpop.f32.mrf.mxu0
    %v1923 = vpop.f32.mrf.mxu0
    %1924 = vdwg.mxu0
    %1925 = vst [vmem:[#allocation2] sm:$0xff] %v1920
    // Predicated region
    $region30: #{mlp_forward.1} parent=1 // pred_check
      _
    $region31: #{mlp_forward.1} parent=1 // pred_check_branch
      %1927 = sbr.rel (0) target = $region33
    $region32: #{mlp_forward.1} parent=1 // pred_region
      %s1929 = ssub.s32 128, 128
      %1930 = vsyncadd [#allocation3], %s1929
      %s1932 = sshll.u32 [#allocation2], 4
      %s1933 = int_to_ptr.vmem [resolvable:$true] %s1932
      %1935 = dma.vmem_to_hbm [thread:$0]  %s1933, 128, %s7, [#allocation3]
    $region33: #{mlp_forward.1} parent=1 // pred_fallthru
      _
    // Predicated region
    $region34: #{mlp_forward.1} parent=1 // pred_check
      _
    $region35: #{mlp_forward.1} parent=1 // pred_check_branch
      %1937 = sbr.rel (0) target = $region37
    $region36: #{mlp_forward.1} parent=1 // pred_region
      %1938 = dma.done [#allocation3], 128
    $region37: #{mlp_forward.1} parent=1 // pred_fallthru
      _
    %1939 = vsyncpa [#allocation3], 1

</llo_original>
